<compile_context>
chip_gen: v5e
topology: v5e:2x2
jax: 0.10.0
libtpu: 0.0.40
codegen_flags: <defaults>
</compile_context>

<pallas_src>
import functools
import math

import jax
import jax.numpy as jnp
from jax.experimental import pallas as pl
from jax.experimental.pallas import tpu as pltpu  # noqa: F401  (TPU backend assumed)


def _rup(n, m=8):
    return ((n + m - 1) // m) * m


def _sigmoid_via_tanh(v):
    # Exact identity: sigmoid(x) = 0.5 * tanh(x/2) + 0.5  (one EUP tanh + cheap VPU fma).
    return 0.5 * jnp.tanh(0.5 * v) + 0.5


# ----------------------------------------------------------------------------
# Fused kernel.
#   r = sigmoid(gi_r + gh_r)            gi already contains b_ir + b_hr
#   z = sigmoid(gi_z + gh_z)            gi already contains b_iz + b_hz
#   n = tanh  (gi_n + r*(gh_n + b_hn))  gi already contains b_in
#   h = n + z*(h_prev - n)              == (1-z)*n + z*h_prev
# ----------------------------------------------------------------------------
def fused_gru_net_kernel(layout, num_layers, input_dim, hidden_dim, output_dim,
                         x_ref, p_ref, out_ref):
    H, H2, H3 = hidden_dim, 2 * hidden_dim, 3 * hidden_dim
    f32 = jnp.float32

    x = x_ref[...]            # (B, T, D) batch_first, consumed directly (no transpose)
    P = p_ref[...]            # (R, 3H) packed parameters (single DMA)
    B, T, D = x.shape

    # ---- one-time (hoisted) parameter views / broadcasts --------------------
    def rows(key, n, cols=H3):
        off = layout[key]                      # static Python int
        return P[off:off + n, :cols]

    w_ih = [rows(("w_ih", l), input_dim if l == 0 else H) for l in range(num_layers)]
    w_hh = [rows(("w_hh", l), H) for l in range(num_layers)]
    b_hn_b = [jnp.broadcast_to(rows(("b_hn", l), 1, H), (B, H))
              for l in range(num_layers)]
    b_gi_b = [jnp.broadcast_to(rows(("b_gi", l), 1), (B, H3))
              for l in range(1, num_layers)]   # layer 0's b_gi is folded below

    # ---- layer-0 input projection hoisted over all T steps (one MXU call) ----
    gi0 = jnp.dot(x.reshape(B * T, D), w_ih[0],
                  preferred_element_type=f32) + rows(("b_gi", 0), 1)
    gi0 = gi0.reshape(B, T, H3)
    gi0_rz = gi0[:, :, :H2]                    # pre-split once (gate boundaries are
    gi0_n = gi0[:, :, H2:]                     # not lane-aligned for H=32)

    # ---- wavefront recurrence; T is small & static -> fully unrolled --------
    h = [jnp.zeros((B, H), f32) for _ in range(num_layers)]
    for t in range(T):
        # layer 0 (input projection already hoisted)
        gh = jnp.dot(h[0], w_hh[0], preferred_element_type=f32)        # (B, 3H)
        rz = _sigmoid_via_tanh(gi0_rz[:, t, :] + gh[:, :H2])           # fused r/z
        r, z = rz[:, :H], rz[:, H:]
        n = jnp.tanh(gi0_n[:, t, :] + r * (gh[:, H2:] + b_hn_b[0]))
        h[0] = n + z * (h[0] - n)

        # layers >= 1 consume h[l-1] of this SAME time step (wavefront); the LLO
        # scheduler can overlap this with layer-0's step t+1.
        for l in range(1, num_layers):
            gi = jnp.dot(h[l - 1], w_ih[l], preferred_element_type=f32) + b_gi_b[l - 1]
            gh = jnp.dot(h[l], w_hh[l], preferred_element_type=f32)
            rz = _sigmoid_via_tanh(gi[:, :H2] + gh[:, :H2])
            r, z = rz[:, :H], rz[:, H:]
            n = jnp.tanh(gi[:, H2:] + r * (gh[:, H2:] + b_hn_b[l]))
            h[l] = n + z * (h[l] - n)

    # ---- head: sigmoid(h_T @ W_fc + b_fc); only the last step is written out ----
    w_fc = rows("w_fc", H, output_dim)         # (H, O)
    b_fc = rows("b_fc", 1, output_dim)         # (1, O)
    logits = jnp.dot(h[num_layers - 1], w_fc, preferred_element_type=f32) + b_fc
    out_ref[...] = jax.nn.sigmoid(logits).astype(out_ref.dtype)


# ----------------------------------------------------------------------------
# Parameter init (PyTorch-style U(-1/sqrt(H), 1/sqrt(H))), bias folding + packing.
# ----------------------------------------------------------------------------
def init_params(key, input_dim, hidden_dim, output_dim, layers):
    k = 1.0 / math.sqrt(hidden_dim)
    gru_layers = []
    for layer in range(layers):
        d_in = input_dim if layer == 0 else hidden_dim
        key, k1, k2, k3, k4 = jax.random.split(key, 5)
        # Stored transposed: (d_in, 3H) / (H, 3H) so in-kernel matmuls are plain x @ W.
        w_ih = jax.random.uniform(k1, (d_in, 3 * hidden_dim), jnp.float32, -k, k)
        w_hh = jax.random.uniform(k2, (hidden_dim, 3 * hidden_dim), jnp.float32, -k, k)
        b_ih = jax.random.uniform(k3, (3 * hidden_dim,), jnp.float32, -k, k)
        b_hh = jax.random.uniform(k4, (3 * hidden_dim,), jnp.float32, -k, k)
        gru_layers.append((w_ih, w_hh, b_ih, b_hh))
    key, k5, k6 = jax.random.split(key, 3)
    w_fc = jax.random.uniform(k5, (hidden_dim, output_dim), jnp.float32, -k, k)
    b_fc = jax.random.uniform(k6, (1, output_dim), jnp.float32, -k, k)
    return {"gru_layers": gru_layers, "w_fc": w_fc, "b_fc": b_fc}


def fold_and_pack_params(params, hidden_dim, output_dim):
    """Fold biases (r/z gates get b_ih+b_hh; b_hn stays inside r*(.)) and pack every
    parameter into ONE (R, 3H) f32 buffer so the kernel needs a single parameter DMA.
    Returns (packed, layout) where layout maps names -> static row offsets."""
    H = hidden_dim
    W = 3 * H
    blocks, layout = [], {}
    cur = 0

    def add(name, arr2d, align=True):
        nonlocal cur
        layout[name] = cur
        blocks.append((cur, arr2d))
        cur += _rup(arr2d.shape[0]) if align else arr2d.shape[0]

    # 8-row-aligned weight blocks first, then single-row bias entries.
    for l, (w_ih, w_hh, _, _) in enumerate(params["gru_layers"]):
        add(("w_ih", l), w_ih)
        add(("w_hh", l), w_hh)
    add("w_fc", params["w_fc"])
    for l, (_, _, b_ih, b_hh) in enumerate(params["gru_layers"]):
        b_gi = b_ih + jnp.concatenate([b_hh[:2 * H], jnp.zeros((H,), jnp.float32)])
        add(("b_gi", l), b_gi.reshape(1, W), align=False)
        add(("b_hn", l), b_hh[2 * H:].reshape(1, H), align=False)
    add("b_fc", params["b_fc"].reshape(1, output_dim), align=False)

    packed = jnp.zeros((_rup(cur), W), jnp.float32)
    for off, arr in blocks:
        packed = packed.at[off:off + arr.shape[0], :arr.shape[1]].set(arr)
    return packed, layout


def make_net_forward(layout, num_layers, input_dim, hidden_dim, output_dim,
                     batch, seq_len, packed_rows):
    kernel = functools.partial(fused_gru_net_kernel, layout, num_layers,
                               input_dim, hidden_dim, output_dim)
    call = pl.pallas_call(
        kernel,
        out_shape=jax.ShapeDtypeStruct((batch, output_dim), jnp.float32),
        in_specs=[pl.BlockSpec((batch, seq_len, input_dim), lambda *_: (0, 0, 0)),
                  pl.BlockSpec((packed_rows, 3 * hidden_dim), lambda *_: (0, 0))],
        out_specs=pl.BlockSpec((batch, output_dim), lambda *_: (0, 0)),
        # No grid: at B=2 a single TensorCore invocation is optimal.  If batch scales,
        # add grid=(nb,) over batch + dimension_semantics=("parallel",) for v7x's 2 TCs.
    )
    return jax.jit(call)


# Pure-JAX reference (unfolded biases, standard formulation) for correctness check.
def net_forward_ref(x_btd, params):
    B, T, _ = x_btd.shape
    x = x_btd
    for (w_ih, w_hh, b_ih, b_hh) in params["gru_layers"]:
        H = w_hh.shape[0]
        h = jnp.zeros((B, H), jnp.float32)
        ys = []
        for t in range(T):
            gi = x[:, t] @ w_ih + b_ih
            gh = h @ w_hh + b_hh
            r = jax.nn.sigmoid(gi[:, :H] + gh[:, :H])
            z = jax.nn.sigmoid(gi[:, H:2 * H] + gh[:, H:2 * H])
            n = jnp.tanh(gi[:, 2 * H:] + r * gh[:, 2 * H:])
            h = (1.0 - z) * n + z * h
            ys.append(h)
        x = jnp.stack(ys, axis=1)  # (B, T, H)
    return jax.nn.sigmoid(x[:, -1] @ params["w_fc"] + params["b_fc"])


if __name__ == "__main__":
    batch, seq_len, input_dim = 2, 8, 4
    hidden_dim, output_dim, layers = 32, 1, 2

    key = jax.random.PRNGKey(0)
    key, pkey, xkey = jax.random.split(key, 3)
    params = init_params(pkey, input_dim, hidden_dim, output_dim, layers)
    packed, layout = fold_and_pack_params(params, hidden_dim, output_dim)
    x = jax.random.normal(xkey, (batch, seq_len, input_dim), jnp.float32)

    fwd = make_net_forward(layout, layers, input_dim, hidden_dim, output_dim,
                           batch, seq_len, packed.shape[0])
    out = jax.block_until_ready(fwd(x, packed))

    ref = net_forward_ref(x, params)
    assert out.shape == (batch, output_dim)
    assert jnp.allclose(out, ref, atol=1e-5, rtol=1e-5), (out, ref)

    print("KERNEL_OK")
</pallas_src>

<mosaic_0001>
module attributes {stable_mosaic.version = 11 : i64} {
  func.func @fused_gru_net_kernel(%arg0: memref<2x8x4xf32, #tpu.memory_space<vmem>>, %arg1: memref<144x96xf32, #tpu.memory_space<vmem>>, %arg2: memref<2x1xf32, #tpu.memory_space<vmem>>) attributes {dimension_semantics = [], scalar_prefetch = 0 : i64, scratch_operands = 0 : i64, tpu.core_type = #tpu.core_type<tc>} {
    %c0 = arith.constant 0 : index
    %c0_0 = arith.constant 0 : index
    %c0_1 = arith.constant 0 : index
    %0 = vector.load %arg0[%c0, %c0_0, %c0_1] : memref<2x8x4xf32, #tpu.memory_space<vmem>>, vector<2x8x4xf32>
    %c0_2 = arith.constant 0 : index
    %c0_3 = arith.constant 0 : index
    %1 = vector.load %arg1[%c0_2, %c0_3] : memref<144x96xf32, #tpu.memory_space<vmem>>, vector<144x96xf32>
    %2 = vector.extract_strided_slice %1 {offsets = [0, 0], sizes = [4, 96], strides = [1, 1]} : vector<144x96xf32> to vector<4x96xf32>
    %3 = vector.extract_strided_slice %1 {offsets = [40, 0], sizes = [32, 96], strides = [1, 1]} : vector<144x96xf32> to vector<32x96xf32>
    %4 = vector.extract_strided_slice %1 {offsets = [8, 0], sizes = [32, 96], strides = [1, 1]} : vector<144x96xf32> to vector<32x96xf32>
    %5 = vector.extract_strided_slice %1 {offsets = [72, 0], sizes = [32, 96], strides = [1, 1]} : vector<144x96xf32> to vector<32x96xf32>
    %6 = vector.extract_strided_slice %1 {offsets = [137, 0], sizes = [1, 32], strides = [1, 1]} : vector<144x96xf32> to vector<1x32xf32>
    %7 = vector.shape_cast %6 : vector<1x32xf32> to vector<1x32xf32>
    %8 = vector.broadcast %7 : vector<1x32xf32> to vector<2x32xf32>
    %9 = vector.extract_strided_slice %1 {offsets = [139, 0], sizes = [1, 32], strides = [1, 1]} : vector<144x96xf32> to vector<1x32xf32>
    %10 = vector.shape_cast %9 : vector<1x32xf32> to vector<1x32xf32>
    %11 = vector.broadcast %10 : vector<1x32xf32> to vector<2x32xf32>
    %12 = vector.extract_strided_slice %1 {offsets = [138, 0], sizes = [1, 96], strides = [1, 1]} : vector<144x96xf32> to vector<1x96xf32>
    %13 = vector.shape_cast %12 : vector<1x96xf32> to vector<1x96xf32>
    %14 = vector.broadcast %13 : vector<1x96xf32> to vector<2x96xf32>
    %15 = vector.shape_cast %0 : vector<2x8x4xf32> to vector<16x4xf32>
    %cst = arith.constant dense<0.000000e+00> : vector<16x96xf32>
    %16 = tpu.matmul %15, %2, %cst {dimension_numbers = #tpu.dot_dimension_numbers<[1], [0], [0], [1], [0, 0, 1, 1], [], []>} : vector<16x4xf32>, vector<4x96xf32>, vector<16x96xf32> -> vector<16x96xf32>
    %17 = vector.extract_strided_slice %1 {offsets = [136, 0], sizes = [1, 96], strides = [1, 1]} : vector<144x96xf32> to vector<1x96xf32>
    %18 = vector.broadcast %17 : vector<1x96xf32> to vector<16x96xf32>
    %19 = arith.addf %16, %18 : vector<16x96xf32>
    %20 = vector.shape_cast %19 : vector<16x96xf32> to vector<2x8x96xf32>
    %21 = vector.extract_strided_slice %20 {offsets = [0, 0, 0], sizes = [2, 8, 64], strides = [1, 1, 1]} : vector<2x8x96xf32> to vector<2x8x64xf32>
    %22 = vector.extract_strided_slice %20 {offsets = [0, 0, 64], sizes = [2, 8, 32], strides = [1, 1, 1]} : vector<2x8x96xf32> to vector<2x8x32xf32>
    %cst_4 = arith.constant 0.000000e+00 : f32
    %23 = vector.broadcast %cst_4 : f32 to vector<2x32xf32>
    %cst_5 = arith.constant 0.000000e+00 : f32
    %24 = vector.broadcast %cst_5 : f32 to vector<2x32xf32>
    %cst_6 = arith.constant dense<0.000000e+00> : vector<2x96xf32>
    %25 = tpu.matmul %23, %4, %cst_6 {dimension_numbers = #tpu.dot_dimension_numbers<[1], [0], [0], [1], [0, 0, 1, 1], [], []>} : vector<2x32xf32>, vector<32x96xf32>, vector<2x96xf32> -> vector<2x96xf32>
    %26 = vector.extract_strided_slice %21 {offsets = [0, 0, 0], sizes = [2, 1, 64], strides = [1, 1, 1]} : vector<2x8x64xf32> to vector<2x1x64xf32>
    %27 = vector.shape_cast %26 : vector<2x1x64xf32> to vector<2x64xf32>
    %28 = vector.extract_strided_slice %25 {offsets = [0, 0], sizes = [2, 64], strides = [1, 1]} : vector<2x96xf32> to vector<2x64xf32>
    %29 = arith.addf %27, %28 : vector<2x64xf32>
    %cst_7 = arith.constant 5.000000e-01 : f32
    %30 = vector.broadcast %cst_7 : f32 to vector<2x64xf32>
    %31 = arith.mulf %30, %29 : vector<2x64xf32>
    %32 = math.tanh %31 : vector<2x64xf32>
    %cst_8 = arith.constant 5.000000e-01 : f32
    %33 = vector.broadcast %cst_8 : f32 to vector<2x64xf32>
    %34 = arith.mulf %33, %32 : vector<2x64xf32>
    %cst_9 = arith.constant 5.000000e-01 : f32
    %35 = vector.broadcast %cst_9 : f32 to vector<2x64xf32>
    %36 = arith.addf %34, %35 : vector<2x64xf32>
    %37 = vector.extract_strided_slice %36 {offsets = [0, 0], sizes = [2, 32], strides = [1, 1]} : vector<2x64xf32> to vector<2x32xf32>
    %38 = vector.extract_strided_slice %36 {offsets = [0, 32], sizes = [2, 32], strides = [1, 1]} : vector<2x64xf32> to vector<2x32xf32>
    %39 = vector.extract_strided_slice %22 {offsets = [0, 0, 0], sizes = [2, 1, 32], strides = [1, 1, 1]} : vector<2x8x32xf32> to vector<2x1x32xf32>
    %40 = vector.shape_cast %39 : vector<2x1x32xf32> to vector<2x32xf32>
    %41 = vector.extract_strided_slice %25 {offsets = [0, 64], sizes = [2, 32], strides = [1, 1]} : vector<2x96xf32> to vector<2x32xf32>
    %42 = arith.addf %41, %8 : vector<2x32xf32>
    %43 = arith.mulf %37, %42 : vector<2x32xf32>
    %44 = arith.addf %40, %43 : vector<2x32xf32>
    %45 = math.tanh %44 : vector<2x32xf32>
    %46 = arith.subf %23, %45 : vector<2x32xf32>
    %47 = arith.mulf %38, %46 : vector<2x32xf32>
    %48 = arith.addf %45, %47 : vector<2x32xf32>
    %cst_10 = arith.constant dense<0.000000e+00> : vector<2x96xf32>
    %49 = tpu.matmul %48, %3, %cst_10 {dimension_numbers = #tpu.dot_dimension_numbers<[1], [0], [0], [1], [0, 0, 1, 1], [], []>} : vector<2x32xf32>, vector<32x96xf32>, vector<2x96xf32> -> vector<2x96xf32>
    %50 = arith.addf %49, %14 : vector<2x96xf32>
    %cst_11 = arith.constant dense<0.000000e+00> : vector<2x96xf32>
    %51 = tpu.matmul %24, %5, %cst_11 {dimension_numbers = #tpu.dot_dimension_numbers<[1], [0], [0], [1], [0, 0, 1, 1], [], []>} : vector<2x32xf32>, vector<32x96xf32>, vector<2x96xf32> -> vector<2x96xf32>
    %52 = vector.extract_strided_slice %50 {offsets = [0, 0], sizes = [2, 64], strides = [1, 1]} : vector<2x96xf32> to vector<2x64xf32>
    %53 = vector.extract_strided_slice %51 {offsets = [0, 0], sizes = [2, 64], strides = [1, 1]} : vector<2x96xf32> to vector<2x64xf32>
    %54 = arith.addf %52, %53 : vector<2x64xf32>
    %cst_12 = arith.constant 5.000000e-01 : f32
    %55 = vector.broadcast %cst_12 : f32 to vector<2x64xf32>
    %56 = arith.mulf %55, %54 : vector<2x64xf32>
    %57 = math.tanh %56 : vector<2x64xf32>
    %cst_13 = arith.constant 5.000000e-01 : f32
    %58 = vector.broadcast %cst_13 : f32 to vector<2x64xf32>
    %59 = arith.mulf %58, %57 : vector<2x64xf32>
    %cst_14 = arith.constant 5.000000e-01 : f32
    %60 = vector.broadcast %cst_14 : f32 to vector<2x64xf32>
    %61 = arith.addf %59, %60 : vector<2x64xf32>
    %62 = vector.extract_strided_slice %61 {offsets = [0, 0], sizes = [2, 32], strides = [1, 1]} : vector<2x64xf32> to vector<2x32xf32>
    %63 = vector.extract_strided_slice %61 {offsets = [0, 32], sizes = [2, 32], strides = [1, 1]} : vector<2x64xf32> to vector<2x32xf32>
    %64 = vector.extract_strided_slice %50 {offsets = [0, 64], sizes = [2, 32], strides = [1, 1]} : vector<2x96xf32> to vector<2x32xf32>
    %65 = vector.extract_strided_slice %51 {offsets = [0, 64], sizes = [2, 32], strides = [1, 1]} : vector<2x96xf32> to vector<2x32xf32>
    %66 = arith.addf %65, %11 : vector<2x32xf32>
    %67 = arith.mulf %62, %66 : vector<2x32xf32>
    %68 = arith.addf %64, %67 : vector<2x32xf32>
    %69 = math.tanh %68 : vector<2x32xf32>
    %70 = arith.subf %24, %69 : vector<2x32xf32>
    %71 = arith.mulf %63, %70 : vector<2x32xf32>
    %72 = arith.addf %69, %71 : vector<2x32xf32>
    %cst_15 = arith.constant dense<0.000000e+00> : vector<2x96xf32>
    %73 = tpu.matmul %48, %4, %cst_15 {dimension_numbers = #tpu.dot_dimension_numbers<[1], [0], [0], [1], [0, 0, 1, 1], [], []>} : vector<2x32xf32>, vector<32x96xf32>, vector<2x96xf32> -> vector<2x96xf32>
    %74 = vector.extract_strided_slice %21 {offsets = [0, 1, 0], sizes = [2, 1, 64], strides = [1, 1, 1]} : vector<2x8x64xf32> to vector<2x1x64xf32>
    %75 = vector.shape_cast %74 : vector<2x1x64xf32> to vector<2x64xf32>
    %76 = vector.extract_strided_slice %73 {offsets = [0, 0], sizes = [2, 64], strides = [1, 1]} : vector<2x96xf32> to vector<2x64xf32>
    %77 = arith.addf %75, %76 : vector<2x64xf32>
    %cst_16 = arith.constant 5.000000e-01 : f32
    %78 = vector.broadcast %cst_16 : f32 to vector<2x64xf32>
    %79 = arith.mulf %78, %77 : vector<2x64xf32>
    %80 = math.tanh %79 : vector<2x64xf32>
    %cst_17 = arith.constant 5.000000e-01 : f32
    %81 = vector.broadcast %cst_17 : f32 to vector<2x64xf32>
    %82 = arith.mulf %81, %80 : vector<2x64xf32>
    %cst_18 = arith.constant 5.000000e-01 : f32
    %83 = vector.broadcast %cst_18 : f32 to vector<2x64xf32>
    %84 = arith.addf %82, %83 : vector<2x64xf32>
    %85 = vector.extract_strided_slice %84 {offsets = [0, 0], sizes = [2, 32], strides = [1, 1]} : vector<2x64xf32> to vector<2x32xf32>
    %86 = vector.extract_strided_slice %84 {offsets = [0, 32], sizes = [2, 32], strides = [1, 1]} : vector<2x64xf32> to vector<2x32xf32>
    %87 = vector.extract_strided_slice %22 {offsets = [0, 1, 0], sizes = [2, 1, 32], strides = [1, 1, 1]} : vector<2x8x32xf32> to vector<2x1x32xf32>
    %88 = vector.shape_cast %87 : vector<2x1x32xf32> to vector<2x32xf32>
    %89 = vector.extract_strided_slice %73 {offsets = [0, 64], sizes = [2, 32], strides = [1, 1]} : vector<2x96xf32> to vector<2x32xf32>
    %90 = arith.addf %89, %8 : vector<2x32xf32>
    %91 = arith.mulf %85, %90 : vector<2x32xf32>
    %92 = arith.addf %88, %91 : vector<2x32xf32>
    %93 = math.tanh %92 : vector<2x32xf32>
    %94 = arith.subf %48, %93 : vector<2x32xf32>
    %95 = arith.mulf %86, %94 : vector<2x32xf32>
    %96 = arith.addf %93, %95 : vector<2x32xf32>
    %cst_19 = arith.constant dense<0.000000e+00> : vector<2x96xf32>
    %97 = tpu.matmul %96, %3, %cst_19 {dimension_numbers = #tpu.dot_dimension_numbers<[1], [0], [0], [1], [0, 0, 1, 1], [], []>} : vector<2x32xf32>, vector<32x96xf32>, vector<2x96xf32> -> vector<2x96xf32>
    %98 = arith.addf %97, %14 : vector<2x96xf32>
    %cst_20 = arith.constant dense<0.000000e+00> : vector<2x96xf32>
    %99 = tpu.matmul %72, %5, %cst_20 {dimension_numbers = #tpu.dot_dimension_numbers<[1], [0], [0], [1], [0, 0, 1, 1], [], []>} : vector<2x32xf32>, vector<32x96xf32>, vector<2x96xf32> -> vector<2x96xf32>
    %100 = vector.extract_strided_slice %98 {offsets = [0, 0], sizes = [2, 64], strides = [1, 1]} : vector<2x96xf32> to vector<2x64xf32>
    %101 = vector.extract_strided_slice %99 {offsets = [0, 0], sizes = [2, 64], strides = [1, 1]} : vector<2x96xf32> to vector<2x64xf32>
    %102 = arith.addf %100, %101 : vector<2x64xf32>
    %cst_21 = arith.constant 5.000000e-01 : f32
    %103 = vector.broadcast %cst_21 : f32 to vector<2x64xf32>
    %104 = arith.mulf %103, %102 : vector<2x64xf32>
    %105 = math.tanh %104 : vector<2x64xf32>
    %cst_22 = arith.constant 5.000000e-01 : f32
    %106 = vector.broadcast %cst_22 : f32 to vector<2x64xf32>
    %107 = arith.mulf %106, %105 : vector<2x64xf32>
    %cst_23 = arith.constant 5.000000e-01 : f32
    %108 = vector.broadcast %cst_23 : f32 to vector<2x64xf32>
    %109 = arith.addf %107, %108 : vector<2x64xf32>
    %110 = vector.extract_strided_slice %109 {offsets = [0, 0], sizes = [2, 32], strides = [1, 1]} : vector<2x64xf32> to vector<2x32xf32>
    %111 = vector.extract_strided_slice %109 {offsets = [0, 32], sizes = [2, 32], strides = [1, 1]} : vector<2x64xf32> to vector<2x32xf32>
    %112 = vector.extract_strided_slice %98 {offsets = [0, 64], sizes = [2, 32], strides = [1, 1]} : vector<2x96xf32> to vector<2x32xf32>
    %113 = vector.extract_strided_slice %99 {offsets = [0, 64], sizes = [2, 32], strides = [1, 1]} : vector<2x96xf32> to vector<2x32xf32>
    %114 = arith.addf %113, %11 : vector<2x32xf32>
    %115 = arith.mulf %110, %114 : vector<2x32xf32>
    %116 = arith.addf %112, %115 : vector<2x32xf32>
    %117 = math.tanh %116 : vector<2x32xf32>
    %118 = arith.subf %72, %117 : vector<2x32xf32>
    %119 = arith.mulf %111, %118 : vector<2x32xf32>
    %120 = arith.addf %117, %119 : vector<2x32xf32>
    %cst_24 = arith.constant dense<0.000000e+00> : vector<2x96xf32>
    %121 = tpu.matmul %96, %4, %cst_24 {dimension_numbers = #tpu.dot_dimension_numbers<[1], [0], [0], [1], [0, 0, 1, 1], [], []>} : vector<2x32xf32>, vector<32x96xf32>, vector<2x96xf32> -> vector<2x96xf32>
    %122 = vector.extract_strided_slice %21 {offsets = [0, 2, 0], sizes = [2, 1, 64], strides = [1, 1, 1]} : vector<2x8x64xf32> to vector<2x1x64xf32>
    %123 = vector.shape_cast %122 : vector<2x1x64xf32> to vector<2x64xf32>
    %124 = vector.extract_strided_slice %121 {offsets = [0, 0], sizes = [2, 64], strides = [1, 1]} : vector<2x96xf32> to vector<2x64xf32>
    %125 = arith.addf %123, %124 : vector<2x64xf32>
    %cst_25 = arith.constant 5.000000e-01 : f32
    %126 = vector.broadcast %cst_25 : f32 to vector<2x64xf32>
    %127 = arith.mulf %126, %125 : vector<2x64xf32>
    %128 = math.tanh %127 : vector<2x64xf32>
    %cst_26 = arith.constant 5.000000e-01 : f32
    %129 = vector.broadcast %cst_26 : f32 to vector<2x64xf32>
    %130 = arith.mulf %129, %128 : vector<2x64xf32>
    %cst_27 = arith.constant 5.000000e-01 : f32
    %131 = vector.broadcast %cst_27 : f32 to vector<2x64xf32>
    %132 = arith.addf %130, %131 : vector<2x64xf32>
    %133 = vector.extract_strided_slice %132 {offsets = [0, 0], sizes = [2, 32], strides = [1, 1]} : vector<2x64xf32> to vector<2x32xf32>
    %134 = vector.extract_strided_slice %132 {offsets = [0, 32], sizes = [2, 32], strides = [1, 1]} : vector<2x64xf32> to vector<2x32xf32>
    %135 = vector.extract_strided_slice %22 {offsets = [0, 2, 0], sizes = [2, 1, 32], strides = [1, 1, 1]} : vector<2x8x32xf32> to vector<2x1x32xf32>
    %136 = vector.shape_cast %135 : vector<2x1x32xf32> to vector<2x32xf32>
    %137 = vector.extract_strided_slice %121 {offsets = [0, 64], sizes = [2, 32], strides = [1, 1]} : vector<2x96xf32> to vector<2x32xf32>
    %138 = arith.addf %137, %8 : vector<2x32xf32>
    %139 = arith.mulf %133, %138 : vector<2x32xf32>
    %140 = arith.addf %136, %139 : vector<2x32xf32>
    %141 = math.tanh %140 : vector<2x32xf32>
    %142 = arith.subf %96, %141 : vector<2x32xf32>
    %143 = arith.mulf %134, %142 : vector<2x32xf32>
    %144 = arith.addf %141, %143 : vector<2x32xf32>
    %cst_28 = arith.constant dense<0.000000e+00> : vector<2x96xf32>
    %145 = tpu.matmul %144, %3, %cst_28 {dimension_numbers = #tpu.dot_dimension_numbers<[1], [0], [0], [1], [0, 0, 1, 1], [], []>} : vector<2x32xf32>, vector<32x96xf32>, vector<2x96xf32> -> vector<2x96xf32>
    %146 = arith.addf %145, %14 : vector<2x96xf32>
    %cst_29 = arith.constant dense<0.000000e+00> : vector<2x96xf32>
    %147 = tpu.matmul %120, %5, %cst_29 {dimension_numbers = #tpu.dot_dimension_numbers<[1], [0], [0], [1], [0, 0, 1, 1], [], []>} : vector<2x32xf32>, vector<32x96xf32>, vector<2x96xf32> -> vector<2x96xf32>
    %148 = vector.extract_strided_slice %146 {offsets = [0, 0], sizes = [2, 64], strides = [1, 1]} : vector<2x96xf32> to vector<2x64xf32>
    %149 = vector.extract_strided_slice %147 {offsets = [0, 0], sizes = [2, 64], strides = [1, 1]} : vector<2x96xf32> to vector<2x64xf32>
    %150 = arith.addf %148, %149 : vector<2x64xf32>
    %cst_30 = arith.constant 5.000000e-01 : f32
    %151 = vector.broadcast %cst_30 : f32 to vector<2x64xf32>
    %152 = arith.mulf %151, %150 : vector<2x64xf32>
    %153 = math.tanh %152 : vector<2x64xf32>
    %cst_31 = arith.constant 5.000000e-01 : f32
    %154 = vector.broadcast %cst_31 : f32 to vector<2x64xf32>
    %155 = arith.mulf %154, %153 : vector<2x64xf32>
    %cst_32 = arith.constant 5.000000e-01 : f32
    %156 = vector.broadcast %cst_32 : f32 to vector<2x64xf32>
    %157 = arith.addf %155, %156 : vector<2x64xf32>
    %158 = vector.extract_strided_slice %157 {offsets = [0, 0], sizes = [2, 32], strides = [1, 1]} : vector<2x64xf32> to vector<2x32xf32>
    %159 = vector.extract_strided_slice %157 {offsets = [0, 32], sizes = [2, 32], strides = [1, 1]} : vector<2x64xf32> to vector<2x32xf32>
    %160 = vector.extract_strided_slice %146 {offsets = [0, 64], sizes = [2, 32], strides = [1, 1]} : vector<2x96xf32> to vector<2x32xf32>
    %161 = vector.extract_strided_slice %147 {offsets = [0, 64], sizes = [2, 32], strides = [1, 1]} : vector<2x96xf32> to vector<2x32xf32>
    %162 = arith.addf %161, %11 : vector<2x32xf32>
    %163 = arith.mulf %158, %162 : vector<2x32xf32>
    %164 = arith.addf %160, %163 : vector<2x32xf32>
    %165 = math.tanh %164 : vector<2x32xf32>
    %166 = arith.subf %120, %165 : vector<2x32xf32>
    %167 = arith.mulf %159, %166 : vector<2x32xf32>
    %168 = arith.addf %165, %167 : vector<2x32xf32>
    %cst_33 = arith.constant dense<0.000000e+00> : vector<2x96xf32>
    %169 = tpu.matmul %144, %4, %cst_33 {dimension_numbers = #tpu.dot_dimension_numbers<[1], [0], [0], [1], [0, 0, 1, 1], [], []>} : vector<2x32xf32>, vector<32x96xf32>, vector<2x96xf32> -> vector<2x96xf32>
    %170 = vector.extract_strided_slice %21 {offsets = [0, 3, 0], sizes = [2, 1, 64], strides = [1, 1, 1]} : vector<2x8x64xf32> to vector<2x1x64xf32>
    %171 = vector.shape_cast %170 : vector<2x1x64xf32> to vector<2x64xf32>
    %172 = vector.extract_strided_slice %169 {offsets = [0, 0], sizes = [2, 64], strides = [1, 1]} : vector<2x96xf32> to vector<2x64xf32>
    %173 = arith.addf %171, %172 : vector<2x64xf32>
    %cst_34 = arith.constant 5.000000e-01 : f32
    %174 = vector.broadcast %cst_34 : f32 to vector<2x64xf32>
    %175 = arith.mulf %174, %173 : vector<2x64xf32>
    %176 = math.tanh %175 : vector<2x64xf32>
    %cst_35 = arith.constant 5.000000e-01 : f32
    %177 = vector.broadcast %cst_35 : f32 to vector<2x64xf32>
    %178 = arith.mulf %177, %176 : vector<2x64xf32>
    %cst_36 = arith.constant 5.000000e-01 : f32
    %179 = vector.broadcast %cst_36 : f32 to vector<2x64xf32>
    %180 = arith.addf %178, %179 : vector<2x64xf32>
    %181 = vector.extract_strided_slice %180 {offsets = [0, 0], sizes = [2, 32], strides = [1, 1]} : vector<2x64xf32> to vector<2x32xf32>
    %182 = vector.extract_strided_slice %180 {offsets = [0, 32], sizes = [2, 32], strides = [1, 1]} : vector<2x64xf32> to vector<2x32xf32>
    %183 = vector.extract_strided_slice %22 {offsets = [0, 3, 0], sizes = [2, 1, 32], strides = [1, 1, 1]} : vector<2x8x32xf32> to vector<2x1x32xf32>
    %184 = vector.shape_cast %183 : vector<2x1x32xf32> to vector<2x32xf32>
    %185 = vector.extract_strided_slice %169 {offsets = [0, 64], sizes = [2, 32], strides = [1, 1]} : vector<2x96xf32> to vector<2x32xf32>
    %186 = arith.addf %185, %8 : vector<2x32xf32>
    %187 = arith.mulf %181, %186 : vector<2x32xf32>
    %188 = arith.addf %184, %187 : vector<2x32xf32>
    %189 = math.tanh %188 : vector<2x32xf32>
    %190 = arith.subf %144, %189 : vector<2x32xf32>
    %191 = arith.mulf %182, %190 : vector<2x32xf32>
    %192 = arith.addf %189, %191 : vector<2x32xf32>
    %cst_37 = arith.constant dense<0.000000e+00> : vector<2x96xf32>
    %193 = tpu.matmul %192, %3, %cst_37 {dimension_numbers = #tpu.dot_dimension_numbers<[1], [0], [0], [1], [0, 0, 1, 1], [], []>} : vector<2x32xf32>, vector<32x96xf32>, vector<2x96xf32> -> vector<2x96xf32>
    %194 = arith.addf %193, %14 : vector<2x96xf32>
    %cst_38 = arith.constant dense<0.000000e+00> : vector<2x96xf32>
    %195 = tpu.matmul %168, %5, %cst_38 {dimension_numbers = #tpu.dot_dimension_numbers<[1], [0], [0], [1], [0, 0, 1, 1], [], []>} : vector<2x32xf32>, vector<32x96xf32>, vector<2x96xf32> -> vector<2x96xf32>
    %196 = vector.extract_strided_slice %194 {offsets = [0, 0], sizes = [2, 64], strides = [1, 1]} : vector<2x96xf32> to vector<2x64xf32>
    %197 = vector.extract_strided_slice %195 {offsets = [0, 0], sizes = [2, 64], strides = [1, 1]} : vector<2x96xf32> to vector<2x64xf32>
    %198 = arith.addf %196, %197 : vector<2x64xf32>
    %cst_39 = arith.constant 5.000000e-01 : f32
    %199 = vector.broadcast %cst_39 : f32 to vector<2x64xf32>
    %200 = arith.mulf %199, %198 : vector<2x64xf32>
    %201 = math.tanh %200 : vector<2x64xf32>
    %cst_40 = arith.constant 5.000000e-01 : f32
    %202 = vector.broadcast %cst_40 : f32 to vector<2x64xf32>
    %203 = arith.mulf %202, %201 : vector<2x64xf32>
    %cst_41 = arith.constant 5.000000e-01 : f32
    %204 = vector.broadcast %cst_41 : f32 to vector<2x64xf32>
    %205 = arith.addf %203, %204 : vector<2x64xf32>
    %206 = vector.extract_strided_slice %205 {offsets = [0, 0], sizes = [2, 32], strides = [1, 1]} : vector<2x64xf32> to vector<2x32xf32>
    %207 = vector.extract_strided_slice %205 {offsets = [0, 32], sizes = [2, 32], strides = [1, 1]} : vector<2x64xf32> to vector<2x32xf32>
    %208 = vector.extract_strided_slice %194 {offsets = [0, 64], sizes = [2, 32], strides = [1, 1]} : vector<2x96xf32> to vector<2x32xf32>
    %209 = vector.extract_strided_slice %195 {offsets = [0, 64], sizes = [2, 32], strides = [1, 1]} : vector<2x96xf32> to vector<2x32xf32>
    %210 = arith.addf %209, %11 : vector<2x32xf32>
    %211 = arith.mulf %206, %210 : vector<2x32xf32>
    %212 = arith.addf %208, %211 : vector<2x32xf32>
    %213 = math.tanh %212 : vector<2x32xf32>
    %214 = arith.subf %168, %213 : vector<2x32xf32>
    %215 = arith.mulf %207, %214 : vector<2x32xf32>
    %216 = arith.addf %213, %215 : vector<2x32xf32>
    %cst_42 = arith.constant dense<0.000000e+00> : vector<2x96xf32>
    %217 = tpu.matmul %192, %4, %cst_42 {dimension_numbers = #tpu.dot_dimension_numbers<[1], [0], [0], [1], [0, 0, 1, 1], [], []>} : vector<2x32xf32>, vector<32x96xf32>, vector<2x96xf32> -> vector<2x96xf32>
    %218 = vector.extract_strided_slice %21 {offsets = [0, 4, 0], sizes = [2, 1, 64], strides = [1, 1, 1]} : vector<2x8x64xf32> to vector<2x1x64xf32>
    %219 = vector.shape_cast %218 : vector<2x1x64xf32> to vector<2x64xf32>
    %220 = vector.extract_strided_slice %217 {offsets = [0, 0], sizes = [2, 64], strides = [1, 1]} : vector<2x96xf32> to vector<2x64xf32>
    %221 = arith.addf %219, %220 : vector<2x64xf32>
    %cst_43 = arith.constant 5.000000e-01 : f32
    %222 = vector.broadcast %cst_43 : f32 to vector<2x64xf32>
    %223 = arith.mulf %222, %221 : vector<2x64xf32>
    %224 = math.tanh %223 : vector<2x64xf32>
    %cst_44 = arith.constant 5.000000e-01 : f32
    %225 = vector.broadcast %cst_44 : f32 to vector<2x64xf32>
    %226 = arith.mulf %225, %224 : vector<2x64xf32>
    %cst_45 = arith.constant 5.000000e-01 : f32
    %227 = vector.broadcast %cst_45 : f32 to vector<2x64xf32>
    %228 = arith.addf %226, %227 : vector<2x64xf32>
    %229 = vector.extract_strided_slice %228 {offsets = [0, 0], sizes = [2, 32], strides = [1, 1]} : vector<2x64xf32> to vector<2x32xf32>
    %230 = vector.extract_strided_slice %228 {offsets = [0, 32], sizes = [2, 32], strides = [1, 1]} : vector<2x64xf32> to vector<2x32xf32>
    %231 = vector.extract_strided_slice %22 {offsets = [0, 4, 0], sizes = [2, 1, 32], strides = [1, 1, 1]} : vector<2x8x32xf32> to vector<2x1x32xf32>
    %232 = vector.shape_cast %231 : vector<2x1x32xf32> to vector<2x32xf32>
    %233 = vector.extract_strided_slice %217 {offsets = [0, 64], sizes = [2, 32], strides = [1, 1]} : vector<2x96xf32> to vector<2x32xf32>
    %234 = arith.addf %233, %8 : vector<2x32xf32>
    %235 = arith.mulf %229, %234 : vector<2x32xf32>
    %236 = arith.addf %232, %235 : vector<2x32xf32>
    %237 = math.tanh %236 : vector<2x32xf32>
    %238 = arith.subf %192, %237 : vector<2x32xf32>
    %239 = arith.mulf %230, %238 : vector<2x32xf32>
    %240 = arith.addf %237, %239 : vector<2x32xf32>
    %cst_46 = arith.constant dense<0.000000e+00> : vector<2x96xf32>
    %241 = tpu.matmul %240, %3, %cst_46 {dimension_numbers = #tpu.dot_dimension_numbers<[1], [0], [0], [1], [0, 0, 1, 1], [], []>} : vector<2x32xf32>, vector<32x96xf32>, vector<2x96xf32> -> vector<2x96xf32>
    %242 = arith.addf %241, %14 : vector<2x96xf32>
    %cst_47 = arith.constant dense<0.000000e+00> : vector<2x96xf32>
    %243 = tpu.matmul %216, %5, %cst_47 {dimension_numbers = #tpu.dot_dimension_numbers<[1], [0], [0], [1], [0, 0, 1, 1], [], []>} : vector<2x32xf32>, vector<32x96xf32>, vector<2x96xf32> -> vector<2x96xf32>
    %244 = vector.extract_strided_slice %242 {offsets = [0, 0], sizes = [2, 64], strides = [1, 1]} : vector<2x96xf32> to vector<2x64xf32>
    %245 = vector.extract_strided_slice %243 {offsets = [0, 0], sizes = [2, 64], strides = [1, 1]} : vector<2x96xf32> to vector<2x64xf32>
    %246 = arith.addf %244, %245 : vector<2x64xf32>
    %cst_48 = arith.constant 5.000000e-01 : f32
    %247 = vector.broadcast %cst_48 : f32 to vector<2x64xf32>
    %248 = arith.mulf %247, %246 : vector<2x64xf32>
    %249 = math.tanh %248 : vector<2x64xf32>
    %cst_49 = arith.constant 5.000000e-01 : f32
    %250 = vector.broadcast %cst_49 : f32 to vector<2x64xf32>
    %251 = arith.mulf %250, %249 : vector<2x64xf32>
    %cst_50 = arith.constant 5.000000e-01 : f32
    %252 = vector.broadcast %cst_50 : f32 to vector<2x64xf32>
    %253 = arith.addf %251, %252 : vector<2x64xf32>
    %254 = vector.extract_strided_slice %253 {offsets = [0, 0], sizes = [2, 32], strides = [1, 1]} : vector<2x64xf32> to vector<2x32xf32>
    %255 = vector.extract_strided_slice %253 {offsets = [0, 32], sizes = [2, 32], strides = [1, 1]} : vector<2x64xf32> to vector<2x32xf32>
    %256 = vector.extract_strided_slice %242 {offsets = [0, 64], sizes = [2, 32], strides = [1, 1]} : vector<2x96xf32> to vector<2x32xf32>
    %257 = vector.extract_strided_slice %243 {offsets = [0, 64], sizes = [2, 32], strides = [1, 1]} : vector<2x96xf32> to vector<2x32xf32>
    %258 = arith.addf %257, %11 : vector<2x32xf32>
    %259 = arith.mulf %254, %258 : vector<2x32xf32>
    %260 = arith.addf %256, %259 : vector<2x32xf32>
    %261 = math.tanh %260 : vector<2x32xf32>
    %262 = arith.subf %216, %261 : vector<2x32xf32>
    %263 = arith.mulf %255, %262 : vector<2x32xf32>
    %264 = arith.addf %261, %263 : vector<2x32xf32>
    %cst_51 = arith.constant dense<0.000000e+00> : vector<2x96xf32>
    %265 = tpu.matmul %240, %4, %cst_51 {dimension_numbers = #tpu.dot_dimension_numbers<[1], [0], [0], [1], [0, 0, 1, 1], [], []>} : vector<2x32xf32>, vector<32x96xf32>, vector<2x96xf32> -> vector<2x96xf32>
    %266 = vector.extract_strided_slice %21 {offsets = [0, 5, 0], sizes = [2, 1, 64], strides = [1, 1, 1]} : vector<2x8x64xf32> to vector<2x1x64xf32>
    %267 = vector.shape_cast %266 : vector<2x1x64xf32> to vector<2x64xf32>
    %268 = vector.extract_strided_slice %265 {offsets = [0, 0], sizes = [2, 64], strides = [1, 1]} : vector<2x96xf32> to vector<2x64xf32>
    %269 = arith.addf %267, %268 : vector<2x64xf32>
    %cst_52 = arith.constant 5.000000e-01 : f32
    %270 = vector.broadcast %cst_52 : f32 to vector<2x64xf32>
    %271 = arith.mulf %270, %269 : vector<2x64xf32>
    %272 = math.tanh %271 : vector<2x64xf32>
    %cst_53 = arith.constant 5.000000e-01 : f32
    %273 = vector.broadcast %cst_53 : f32 to vector<2x64xf32>
    %274 = arith.mulf %273, %272 : vector<2x64xf32>
    %cst_54 = arith.constant 5.000000e-01 : f32
    %275 = vector.broadcast %cst_54 : f32 to vector<2x64xf32>
    %276 = arith.addf %274, %275 : vector<2x64xf32>
    %277 = vector.extract_strided_slice %276 {offsets = [0, 0], sizes = [2, 32], strides = [1, 1]} : vector<2x64xf32> to vector<2x32xf32>
    %278 = vector.extract_strided_slice %276 {offsets = [0, 32], sizes = [2, 32], strides = [1, 1]} : vector<2x64xf32> to vector<2x32xf32>
    %279 = vector.extract_strided_slice %22 {offsets = [0, 5, 0], sizes = [2, 1, 32], strides = [1, 1, 1]} : vector<2x8x32xf32> to vector<2x1x32xf32>
    %280 = vector.shape_cast %279 : vector<2x1x32xf32> to vector<2x32xf32>
    %281 = vector.extract_strided_slice %265 {offsets = [0, 64], sizes = [2, 32], strides = [1, 1]} : vector<2x96xf32> to vector<2x32xf32>
    %282 = arith.addf %281, %8 : vector<2x32xf32>
    %283 = arith.mulf %277, %282 : vector<2x32xf32>
    %284 = arith.addf %280, %283 : vector<2x32xf32>
    %285 = math.tanh %284 : vector<2x32xf32>
    %286 = arith.subf %240, %285 : vector<2x32xf32>
    %287 = arith.mulf %278, %286 : vector<2x32xf32>
    %288 = arith.addf %285, %287 : vector<2x32xf32>
    %cst_55 = arith.constant dense<0.000000e+00> : vector<2x96xf32>
    %289 = tpu.matmul %288, %3, %cst_55 {dimension_numbers = #tpu.dot_dimension_numbers<[1], [0], [0], [1], [0, 0, 1, 1], [], []>} : vector<2x32xf32>, vector<32x96xf32>, vector<2x96xf32> -> vector<2x96xf32>
    %290 = arith.addf %289, %14 : vector<2x96xf32>
    %cst_56 = arith.constant dense<0.000000e+00> : vector<2x96xf32>
    %291 = tpu.matmul %264, %5, %cst_56 {dimension_numbers = #tpu.dot_dimension_numbers<[1], [0], [0], [1], [0, 0, 1, 1], [], []>} : vector<2x32xf32>, vector<32x96xf32>, vector<2x96xf32> -> vector<2x96xf32>
    %292 = vector.extract_strided_slice %290 {offsets = [0, 0], sizes = [2, 64], strides = [1, 1]} : vector<2x96xf32> to vector<2x64xf32>
    %293 = vector.extract_strided_slice %291 {offsets = [0, 0], sizes = [2, 64], strides = [1, 1]} : vector<2x96xf32> to vector<2x64xf32>
    %294 = arith.addf %292, %293 : vector<2x64xf32>
    %cst_57 = arith.constant 5.000000e-01 : f32
    %295 = vector.broadcast %cst_57 : f32 to vector<2x64xf32>
    %296 = arith.mulf %295, %294 : vector<2x64xf32>
    %297 = math.tanh %296 : vector<2x64xf32>
    %cst_58 = arith.constant 5.000000e-01 : f32
    %298 = vector.broadcast %cst_58 : f32 to vector<2x64xf32>
    %299 = arith.mulf %298, %297 : vector<2x64xf32>
    %cst_59 = arith.constant 5.000000e-01 : f32
    %300 = vector.broadcast %cst_59 : f32 to vector<2x64xf32>
    %301 = arith.addf %299, %300 : vector<2x64xf32>
    %302 = vector.extract_strided_slice %301 {offsets = [0, 0], sizes = [2, 32], strides = [1, 1]} : vector<2x64xf32> to vector<2x32xf32>
    %303 = vector.extract_strided_slice %301 {offsets = [0, 32], sizes = [2, 32], strides = [1, 1]} : vector<2x64xf32> to vector<2x32xf32>
    %304 = vector.extract_strided_slice %290 {offsets = [0, 64], sizes = [2, 32], strides = [1, 1]} : vector<2x96xf32> to vector<2x32xf32>
    %305 = vector.extract_strided_slice %291 {offsets = [0, 64], sizes = [2, 32], strides = [1, 1]} : vector<2x96xf32> to vector<2x32xf32>
    %306 = arith.addf %305, %11 : vector<2x32xf32>
    %307 = arith.mulf %302, %306 : vector<2x32xf32>
    %308 = arith.addf %304, %307 : vector<2x32xf32>
    %309 = math.tanh %308 : vector<2x32xf32>
    %310 = arith.subf %264, %309 : vector<2x32xf32>
    %311 = arith.mulf %303, %310 : vector<2x32xf32>
    %312 = arith.addf %309, %311 : vector<2x32xf32>
    %cst_60 = arith.constant dense<0.000000e+00> : vector<2x96xf32>
    %313 = tpu.matmul %288, %4, %cst_60 {dimension_numbers = #tpu.dot_dimension_numbers<[1], [0], [0], [1], [0, 0, 1, 1], [], []>} : vector<2x32xf32>, vector<32x96xf32>, vector<2x96xf32> -> vector<2x96xf32>
    %314 = vector.extract_strided_slice %21 {offsets = [0, 6, 0], sizes = [2, 1, 64], strides = [1, 1, 1]} : vector<2x8x64xf32> to vector<2x1x64xf32>
    %315 = vector.shape_cast %314 : vector<2x1x64xf32> to vector<2x64xf32>
    %316 = vector.extract_strided_slice %313 {offsets = [0, 0], sizes = [2, 64], strides = [1, 1]} : vector<2x96xf32> to vector<2x64xf32>
    %317 = arith.addf %315, %316 : vector<2x64xf32>
    %cst_61 = arith.constant 5.000000e-01 : f32
    %318 = vector.broadcast %cst_61 : f32 to vector<2x64xf32>
    %319 = arith.mulf %318, %317 : vector<2x64xf32>
    %320 = math.tanh %319 : vector<2x64xf32>
    %cst_62 = arith.constant 5.000000e-01 : f32
    %321 = vector.broadcast %cst_62 : f32 to vector<2x64xf32>
    %322 = arith.mulf %321, %320 : vector<2x64xf32>
    %cst_63 = arith.constant 5.000000e-01 : f32
    %323 = vector.broadcast %cst_63 : f32 to vector<2x64xf32>
    %324 = arith.addf %322, %323 : vector<2x64xf32>
    %325 = vector.extract_strided_slice %324 {offsets = [0, 0], sizes = [2, 32], strides = [1, 1]} : vector<2x64xf32> to vector<2x32xf32>
    %326 = vector.extract_strided_slice %324 {offsets = [0, 32], sizes = [2, 32], strides = [1, 1]} : vector<2x64xf32> to vector<2x32xf32>
    %327 = vector.extract_strided_slice %22 {offsets = [0, 6, 0], sizes = [2, 1, 32], strides = [1, 1, 1]} : vector<2x8x32xf32> to vector<2x1x32xf32>
    %328 = vector.shape_cast %327 : vector<2x1x32xf32> to vector<2x32xf32>
    %329 = vector.extract_strided_slice %313 {offsets = [0, 64], sizes = [2, 32], strides = [1, 1]} : vector<2x96xf32> to vector<2x32xf32>
    %330 = arith.addf %329, %8 : vector<2x32xf32>
    %331 = arith.mulf %325, %330 : vector<2x32xf32>
    %332 = arith.addf %328, %331 : vector<2x32xf32>
    %333 = math.tanh %332 : vector<2x32xf32>
    %334 = arith.subf %288, %333 : vector<2x32xf32>
    %335 = arith.mulf %326, %334 : vector<2x32xf32>
    %336 = arith.addf %333, %335 : vector<2x32xf32>
    %cst_64 = arith.constant dense<0.000000e+00> : vector<2x96xf32>
    %337 = tpu.matmul %336, %3, %cst_64 {dimension_numbers = #tpu.dot_dimension_numbers<[1], [0], [0], [1], [0, 0, 1, 1], [], []>} : vector<2x32xf32>, vector<32x96xf32>, vector<2x96xf32> -> vector<2x96xf32>
    %338 = arith.addf %337, %14 : vector<2x96xf32>
    %cst_65 = arith.constant dense<0.000000e+00> : vector<2x96xf32>
    %339 = tpu.matmul %312, %5, %cst_65 {dimension_numbers = #tpu.dot_dimension_numbers<[1], [0], [0], [1], [0, 0, 1, 1], [], []>} : vector<2x32xf32>, vector<32x96xf32>, vector<2x96xf32> -> vector<2x96xf32>
    %340 = vector.extract_strided_slice %338 {offsets = [0, 0], sizes = [2, 64], strides = [1, 1]} : vector<2x96xf32> to vector<2x64xf32>
    %341 = vector.extract_strided_slice %339 {offsets = [0, 0], sizes = [2, 64], strides = [1, 1]} : vector<2x96xf32> to vector<2x64xf32>
    %342 = arith.addf %340, %341 : vector<2x64xf32>
    %cst_66 = arith.constant 5.000000e-01 : f32
    %343 = vector.broadcast %cst_66 : f32 to vector<2x64xf32>
    %344 = arith.mulf %343, %342 : vector<2x64xf32>
    %345 = math.tanh %344 : vector<2x64xf32>
    %cst_67 = arith.constant 5.000000e-01 : f32
    %346 = vector.broadcast %cst_67 : f32 to vector<2x64xf32>
    %347 = arith.mulf %346, %345 : vector<2x64xf32>
    %cst_68 = arith.constant 5.000000e-01 : f32
    %348 = vector.broadcast %cst_68 : f32 to vector<2x64xf32>
    %349 = arith.addf %347, %348 : vector<2x64xf32>
    %350 = vector.extract_strided_slice %349 {offsets = [0, 0], sizes = [2, 32], strides = [1, 1]} : vector<2x64xf32> to vector<2x32xf32>
    %351 = vector.extract_strided_slice %349 {offsets = [0, 32], sizes = [2, 32], strides = [1, 1]} : vector<2x64xf32> to vector<2x32xf32>
    %352 = vector.extract_strided_slice %338 {offsets = [0, 64], sizes = [2, 32], strides = [1, 1]} : vector<2x96xf32> to vector<2x32xf32>
    %353 = vector.extract_strided_slice %339 {offsets = [0, 64], sizes = [2, 32], strides = [1, 1]} : vector<2x96xf32> to vector<2x32xf32>
    %354 = arith.addf %353, %11 : vector<2x32xf32>
    %355 = arith.mulf %350, %354 : vector<2x32xf32>
    %356 = arith.addf %352, %355 : vector<2x32xf32>
    %357 = math.tanh %356 : vector<2x32xf32>
    %358 = arith.subf %312, %357 : vector<2x32xf32>
    %359 = arith.mulf %351, %358 : vector<2x32xf32>
    %360 = arith.addf %357, %359 : vector<2x32xf32>
    %cst_69 = arith.constant dense<0.000000e+00> : vector<2x96xf32>
    %361 = tpu.matmul %336, %4, %cst_69 {dimension_numbers = #tpu.dot_dimension_numbers<[1], [0], [0], [1], [0, 0, 1, 1], [], []>} : vector<2x32xf32>, vector<32x96xf32>, vector<2x96xf32> -> vector<2x96xf32>
    %362 = vector.extract_strided_slice %21 {offsets = [0, 7, 0], sizes = [2, 1, 64], strides = [1, 1, 1]} : vector<2x8x64xf32> to vector<2x1x64xf32>
    %363 = vector.shape_cast %362 : vector<2x1x64xf32> to vector<2x64xf32>
    %364 = vector.extract_strided_slice %361 {offsets = [0, 0], sizes = [2, 64], strides = [1, 1]} : vector<2x96xf32> to vector<2x64xf32>
    %365 = arith.addf %363, %364 : vector<2x64xf32>
    %cst_70 = arith.constant 5.000000e-01 : f32
    %366 = vector.broadcast %cst_70 : f32 to vector<2x64xf32>
    %367 = arith.mulf %366, %365 : vector<2x64xf32>
    %368 = math.tanh %367 : vector<2x64xf32>
    %cst_71 = arith.constant 5.000000e-01 : f32
    %369 = vector.broadcast %cst_71 : f32 to vector<2x64xf32>
    %370 = arith.mulf %369, %368 : vector<2x64xf32>
    %cst_72 = arith.constant 5.000000e-01 : f32
    %371 = vector.broadcast %cst_72 : f32 to vector<2x64xf32>
    %372 = arith.addf %370, %371 : vector<2x64xf32>
    %373 = vector.extract_strided_slice %372 {offsets = [0, 0], sizes = [2, 32], strides = [1, 1]} : vector<2x64xf32> to vector<2x32xf32>
    %374 = vector.extract_strided_slice %372 {offsets = [0, 32], sizes = [2, 32], strides = [1, 1]} : vector<2x64xf32> to vector<2x32xf32>
    %375 = vector.extract_strided_slice %22 {offsets = [0, 7, 0], sizes = [2, 1, 32], strides = [1, 1, 1]} : vector<2x8x32xf32> to vector<2x1x32xf32>
    %376 = vector.shape_cast %375 : vector<2x1x32xf32> to vector<2x32xf32>
    %377 = vector.extract_strided_slice %361 {offsets = [0, 64], sizes = [2, 32], strides = [1, 1]} : vector<2x96xf32> to vector<2x32xf32>
    %378 = arith.addf %377, %8 : vector<2x32xf32>
    %379 = arith.mulf %373, %378 : vector<2x32xf32>
    %380 = arith.addf %376, %379 : vector<2x32xf32>
    %381 = math.tanh %380 : vector<2x32xf32>
    %382 = arith.subf %336, %381 : vector<2x32xf32>
    %383 = arith.mulf %374, %382 : vector<2x32xf32>
    %384 = arith.addf %381, %383 : vector<2x32xf32>
    %cst_73 = arith.constant dense<0.000000e+00> : vector<2x96xf32>
    %385 = tpu.matmul %384, %3, %cst_73 {dimension_numbers = #tpu.dot_dimension_numbers<[1], [0], [0], [1], [0, 0, 1, 1], [], []>} : vector<2x32xf32>, vector<32x96xf32>, vector<2x96xf32> -> vector<2x96xf32>
    %386 = arith.addf %385, %14 : vector<2x96xf32>
    %cst_74 = arith.constant dense<0.000000e+00> : vector<2x96xf32>
    %387 = tpu.matmul %360, %5, %cst_74 {dimension_numbers = #tpu.dot_dimension_numbers<[1], [0], [0], [1], [0, 0, 1, 1], [], []>} : vector<2x32xf32>, vector<32x96xf32>, vector<2x96xf32> -> vector<2x96xf32>
    %388 = vector.extract_strided_slice %386 {offsets = [0, 0], sizes = [2, 64], strides = [1, 1]} : vector<2x96xf32> to vector<2x64xf32>
    %389 = vector.extract_strided_slice %387 {offsets = [0, 0], sizes = [2, 64], strides = [1, 1]} : vector<2x96xf32> to vector<2x64xf32>
    %390 = arith.addf %388, %389 : vector<2x64xf32>
    %cst_75 = arith.constant 5.000000e-01 : f32
    %391 = vector.broadcast %cst_75 : f32 to vector<2x64xf32>
    %392 = arith.mulf %391, %390 : vector<2x64xf32>
    %393 = math.tanh %392 : vector<2x64xf32>
    %cst_76 = arith.constant 5.000000e-01 : f32
    %394 = vector.broadcast %cst_76 : f32 to vector<2x64xf32>
    %395 = arith.mulf %394, %393 : vector<2x64xf32>
    %cst_77 = arith.constant 5.000000e-01 : f32
    %396 = vector.broadcast %cst_77 : f32 to vector<2x64xf32>
    %397 = arith.addf %395, %396 : vector<2x64xf32>
    %398 = vector.extract_strided_slice %397 {offsets = [0, 0], sizes = [2, 32], strides = [1, 1]} : vector<2x64xf32> to vector<2x32xf32>
    %399 = vector.extract_strided_slice %397 {offsets = [0, 32], sizes = [2, 32], strides = [1, 1]} : vector<2x64xf32> to vector<2x32xf32>
    %400 = vector.extract_strided_slice %386 {offsets = [0, 64], sizes = [2, 32], strides = [1, 1]} : vector<2x96xf32> to vector<2x32xf32>
    %401 = vector.extract_strided_slice %387 {offsets = [0, 64], sizes = [2, 32], strides = [1, 1]} : vector<2x96xf32> to vector<2x32xf32>
    %402 = arith.addf %401, %11 : vector<2x32xf32>
    %403 = arith.mulf %398, %402 : vector<2x32xf32>
    %404 = arith.addf %400, %403 : vector<2x32xf32>
    %405 = math.tanh %404 : vector<2x32xf32>
    %406 = arith.subf %360, %405 : vector<2x32xf32>
    %407 = arith.mulf %399, %406 : vector<2x32xf32>
    %408 = arith.addf %405, %407 : vector<2x32xf32>
    %409 = vector.extract_strided_slice %1 {offsets = [104, 0], sizes = [32, 1], strides = [1, 1]} : vector<144x96xf32> to vector<32x1xf32>
    %410 = vector.extract_strided_slice %1 {offsets = [140, 0], sizes = [1, 1], strides = [1, 1]} : vector<144x96xf32> to vector<1x1xf32>
    %cst_78 = arith.constant dense<0.000000e+00> : vector<2x1xf32>
    %411 = tpu.matmul %408, %409, %cst_78 {dimension_numbers = #tpu.dot_dimension_numbers<[1], [0], [0], [1], [0, 0, 1, 1], [], []>} : vector<2x32xf32>, vector<32x1xf32>, vector<2x1xf32> -> vector<2x1xf32>
    %412 = vector.broadcast %410 : vector<1x1xf32> to vector<2x1xf32>
    %413 = arith.addf %411, %412 : vector<2x1xf32>
    %414 = arith.negf %413 : vector<2x1xf32>
    %415 = math.exp %414 : vector<2x1xf32>
    %cst_79 = arith.constant 1.000000e+00 : f32
    %416 = vector.broadcast %cst_79 : f32 to vector<2x1xf32>
    %417 = arith.addf %416, %415 : vector<2x1xf32>
    %418 = arith.divf %416, %417 : vector<2x1xf32>
    %c0_80 = arith.constant 0 : index
    %c0_81 = arith.constant 0 : index
    %419 = vector.load %arg2[%c0_80, %c0_81] : memref<2x1xf32, #tpu.memory_space<vmem>>, vector<2x1xf32>
    tpu.vector_store %arg2[%c0_80, %c0_81], %418 {strides = array<i32>} : memref<2x1xf32, #tpu.memory_space<vmem>>, vector<2x1xf32>,
    return
  }
}

</mosaic_0001>

<llo_original>
// kernel: tpu_custom_call.1
$region0: #{tpu_custom_call.1}
  #allocation0 [shape = 'u32[]', space=smem, size = 0x4, offset = 0x4, fixed_abs, tag = 'smem constant byte address 0x4 - core index']
  #allocation1 [shape = 'u32[72,128]{1,0:T(1,128)}', space=vmem, size = 0x9000, scoped, tag = 'internal scratch']
  %s0 = inlined_call_operand.vmem [shape: f32[2,8,4], index: 0, kind: input, shape index: {}]
  %s1 = inlined_call_operand.hbm [shape: f32[144,96], index: 1, kind: input, shape index: {}]
  %s2 = inlined_call_operand.vmem [shape: f32[2,1], index: 2, kind: output, shape index: {}]
  %s3 = sld [smem:[#allocation0]]
  $region22: #{tpu_custom_call.1} parent=0
    _
  %s5 = ssub.s32 1, %s3
  %s6 = scalar_select 0, %s5, %s3
  $region1: #{tpu_custom_call.1} parent=0
    #allocation2 [shape = 'u8[73728]{0}', space=vmem, size = 0x12000, scoped, tag = 'input window, operand 1, single buffered']
    #allocation3 [shape = 's32[1]{0}', space=sflag, size = 0x4, scoped, tag = 'scoped memory for tpu_custom_call.1']
    %7 = vsyncpa [#allocation3], 0
    // Predicated region
    $region2: #{tpu_custom_call.1} parent=1 // pred_check
      _
    $region3: #{tpu_custom_call.1} parent=1 // pred_check_branch
      %9 = sbr.rel (0) target = $region5
    $region4: #{tpu_custom_call.1} parent=1 // pred_region
      _
    $region5: #{tpu_custom_call.1} parent=1 // pred_fallthru
      _
    // Predicated region
    $region6: #{tpu_custom_call.1} parent=1 // pred_check
      _
    $region7: #{tpu_custom_call.1} parent=1 // pred_check_branch
      %11 = sbr.rel (0) target = $region9
    $region8: #{tpu_custom_call.1} parent=1 // pred_region
      %13 = vsyncadd [#allocation3], 0
      %s14 = sshll.u32 %s1, 4
      %s15 = int_to_ptr.hbm [resolvable:$true] %s14
      %s16 = sshll.u32 [#allocation2], 4
      %s17 = int_to_ptr.vmem [resolvable:$true] %s16
      %22 = dma.hbm_to_vmem [thread:$0]  %s15, 2304, %s17, [#allocation3], 128, 128, 8
    $region9: #{tpu_custom_call.1} parent=1 // pred_fallthru
      _
    // Predicated region
    $region10: #{tpu_custom_call.1} parent=1 // pred_check
      _
    $region11: #{tpu_custom_call.1} parent=1 // pred_check_branch
      %24 = sbr.rel (0) target = $region13
    $region12: #{tpu_custom_call.1} parent=1 // pred_region
      %26 = dma.done [#allocation3], 2304
    $region13: #{tpu_custom_call.1} parent=1 // pred_fallthru
      _
    %v27 = vld [vmem:[%s0] sm:$0xff]
    %v28 = vld [vmem:[%s0 + $0x8] sm:$0xff]
    %v29 = vld [vmem:[#allocation2] sm:$0xff]
    %v30 = vld [vmem:[#allocation2 + $0x8] sm:$0xff]
    %v31 = vld [vmem:[#allocation2 + $0x10] sm:$0xff]
    %v32 = vld [vmem:[#allocation2 + $0x18] sm:$0xff]
    %v33 = vld [vmem:[#allocation2 + $0x20] sm:$0xff]
    %v34 = vld [vmem:[#allocation2 + $0x28] sm:$0xff]
    %v35 = vld [vmem:[#allocation2 + $0x30] sm:$0xff]
    %v36 = vld [vmem:[#allocation2 + $0x38] sm:$0xff]
    %v37 = vld [vmem:[#allocation2 + $0x40] sm:$0xff]
    %v38 = vld [vmem:[#allocation2 + $0x48] sm:$0xff]
    %v39 = vld [vmem:[#allocation2 + $0x50] sm:$0xff]
    %v40 = vld [vmem:[#allocation2 + $0x58] sm:$0xff]
    %v41 = vld [vmem:[#allocation2 + $0x60] sm:$0xff]
    %v42 = vld [vmem:[#allocation2 + $0x68] sm:$0xff]
    %v43 = vld [vmem:[#allocation2 + $0x70] sm:$0xff]
    %v44 = vld [vmem:[#allocation2 + $0x78] sm:$0xff]
    %v45 = vld [vmem:[#allocation2 + $0x80] sm:$0xff]
    %v46 = vld [vmem:[#allocation2 + $0x88] sm:$0xff]
    %v47 = vperm.slane %v46, 1
    %v48 = vperm.slane %v46, 3
    %v49 = vperm.slane %v46, 2
    %v50 = vperm.slane %v46, 0
    %vm51 = vcmask 31744
    %v53 = vsel %vm51, %v27, 0
    %v56 = vsel %vm51, %v28, 0
    %vm58 = vcmask 1043456
    %v60 = vsel %vm58, %v29, 0
    %62 = vmatpush.msra.mxu0 0.0
    %63 = vmatpush.msra.mxu0 0.0
    %64 = vmatpush.msra.mxu0 0.0
    %65 = vmatpush.msra.mxu0 0.0
    %66 = vmatpush.msra.mxu0 0.0
    %67 = vmatpush.msra.mxu0 0.0
    %68 = vmatpush.msra.mxu0 0.0
    %69 = vmatpush.msra.mxu0 0.0
    %70 = vmatpush.msra.mxu0 0.0
    %71 = vmatpush.msra.mxu0 0.0
    %72 = vmatpush.msra.mxu0 0.0
    %73 = vmatpush.msra.mxu0 0.0
    %74 = vmatpush.msra.mxu0 0.0
    %75 = vmatpush.msra.mxu0 0.0
    %76 = vmatpush.msra.mxu0 0.0
    %77 = vmatpush.msra.mxu0 %v60
    %78 = vmatmul.f32.gmra.mxu0 %v53
    %v79 = vpop.f32.mrf.mxu0
    %v80 = vadd.f32 %v50, %v79
    %81 = vmatmul.f32.gmra.mxu0 %v56
    %v82 = vpop.f32.mrf.mxu0
    %v83 = vadd.f32 %v50, %v82
    %84 = vdwg.mxu0
    %vm85 = vcmask 261120
    %v87 = vsel %vm85, 0.0, 0
    %89 = vmatpush.msra.mxu0 0.0
    %90 = vmatpush.msra.mxu0 0.0
    %91 = vmatpush.msra.mxu0 0.0
    %92 = vmatpush.msra.mxu0 0.0
    %93 = vmatpush.msra.mxu0 0.0
    %94 = vmatpush.msra.mxu0 0.0
    %95 = vmatpush.msra.mxu0 0.0
    %96 = vmatpush.msra.mxu0 0.0
    %97 = vmatpush.msra.mxu0 0.0
    %98 = vmatpush.msra.mxu0 0.0
    %99 = vmatpush.msra.mxu0 0.0
    %100 = vmatpush.msra.mxu0 0.0
    %101 = vmatpush.msra.mxu0 %v33
    %102 = vmatpush.msra.mxu0 %v32
    %103 = vmatpush.msra.mxu0 %v31
    %104 = vmatpush.msra.mxu0 %v30
    %105 = vmatmul.f32.gmra.mxu0 %v87
    %v106 = vpop.f32.mrf.mxu0
    %v107 = vadd.f32 0.0, %v106
    %108 = vdwg.mxu0
    %v110 = vrot.slane %v107, 1
    %v113 = vadd.f32 %v80, %v107
    %v114 = vadd.f32 %v83, %v110
    %v115 = vmul.f32 %v113, 0.5
    %v116 = vmul.f32 %v114, 0.5
    %v117 = vtanh.pop %v115
    %v118 = vtanh.pop %v116
    %v119 = vmul.f32 %v117, 0.5
    %v120 = vmul.f32 %v118, 0.5
    %v121 = vadd.f32 %v119, 0.5
    %v122 = vadd.f32 %v120, 0.5
    %124 = vrot.lane.b32.xlu0 %v47, 64
    %v125 = vpop.permute.xlu0 %124
    %v127 = vadd.f32 %v107, %v125
    %v129 = vrot.slane %v127, 1
    %130 = vrot.lane.b32.xlu0 %v127, 64
    %v131 = vpop.permute.xlu0 %130
    %132 = vrot.lane.b32.xlu0 %v129, 64
    %v133 = vpop.permute.xlu0 %132
    %v136 = vmul.f32 %v121, %v131
    %v137 = vmul.f32 %v122, %v133
    %140 = vrot.lane.b32.xlu0 %v136, 64
    %v141 = vpop.permute.xlu0 %140
    %142 = vrot.lane.b32.xlu0 %v137, 64
    %v143 = vpop.permute.xlu0 %142
    %v146 = vadd.f32 %v80, %v141
    %v147 = vadd.f32 %v83, %v143
    %v148 = vtanh.pop %v146
    %v149 = vtanh.pop %v147
    %v150 = vsub.f32 0.0, %v148
    %v151 = vsub.f32 0.0, %v149
    %154 = vrot.lane.b32.xlu0 %v150, 96
    %v155 = vpop.permute.xlu0 %154
    %156 = vrot.lane.b32.xlu0 %v151, 96
    %v157 = vpop.permute.xlu0 %156
    %v160 = vmul.f32 %v121, %v155
    %v161 = vmul.f32 %v122, %v157
    %164 = vrot.lane.b32.xlu0 %v160, 32
    %v165 = vpop.permute.xlu0 %164
    %166 = vrot.lane.b32.xlu0 %v161, 32
    %v167 = vpop.permute.xlu0 %166
    %v170 = vadd.f32 %v148, %v165
    %v171 = vadd.f32 %v149, %v167
    %v174 = vrot.slane %v171, 7
    %vm175 = vcmask 1041409
    %v176 = vsel %vm175, %v174, %v170
    %177 = vrot.lane.b32.xlu0 %v176, 64
    %v178 = vpop.permute.xlu0 %177
    %v179 = vsel %vm85, %v178, 0
    %181 = vmatpush.msra.mxu0 0.0
    %182 = vmatpush.msra.mxu0 0.0
    %183 = vmatpush.msra.mxu0 0.0
    %184 = vmatpush.msra.mxu0 0.0
    %185 = vmatpush.msra.mxu0 0.0
    %186 = vmatpush.msra.mxu0 0.0
    %187 = vmatpush.msra.mxu0 0.0
    %188 = vmatpush.msra.mxu0 0.0
    %189 = vmatpush.msra.mxu0 0.0
    %190 = vmatpush.msra.mxu0 0.0
    %191 = vmatpush.msra.mxu0 0.0
    %192 = vmatpush.msra.mxu0 0.0
    %193 = vmatpush.msra.mxu0 %v37
    %194 = vmatpush.msra.mxu0 %v36
    %195 = vmatpush.msra.mxu0 %v35
    %196 = vmatpush.msra.mxu0 %v34
    %197 = vmatmul.f32.gmra.mxu0 %v179
    %v198 = vpop.f32.mrf.mxu0
    %v199 = vadd.f32 %v49, %v198
    %200 = vdwg.mxu0
    %201 = vmatpush.msra.mxu0 0.0
    %202 = vmatpush.msra.mxu0 0.0
    %203 = vmatpush.msra.mxu0 0.0
    %204 = vmatpush.msra.mxu0 0.0
    %205 = vmatpush.msra.mxu0 0.0
    %206 = vmatpush.msra.mxu0 0.0
    %207 = vmatpush.msra.mxu0 0.0
    %208 = vmatpush.msra.mxu0 0.0
    %209 = vmatpush.msra.mxu0 0.0
    %210 = vmatpush.msra.mxu0 0.0
    %211 = vmatpush.msra.mxu0 0.0
    %212 = vmatpush.msra.mxu0 0.0
    %213 = vmatpush.msra.mxu0 %v41
    %214 = vmatpush.msra.mxu0 %v40
    %215 = vmatpush.msra.mxu0 %v39
    %216 = vmatpush.msra.mxu0 %v38
    %217 = vmatmul.f32.gmra.mxu0 %v87
    %v218 = vpop.f32.mrf.mxu0
    %v219 = vadd.f32 0.0, %v218
    %220 = vdwg.mxu0
    %v221 = vadd.f32 %v199, %v219
    %v222 = vmul.f32 %v221, 0.5
    %v223 = vtanh.pop %v222
    %v224 = vmul.f32 %v223, 0.5
    %v225 = vadd.f32 %v224, 0.5
    %227 = vrot.lane.b32.xlu0 %v48, 64
    %v228 = vpop.permute.xlu0 %227
    %v230 = vadd.f32 %v219, %v228
    %232 = vrot.lane.b32.xlu0 %v230, 64
    %v233 = vpop.permute.xlu0 %232
    %v235 = vmul.f32 %v225, %v233
    %237 = vrot.lane.b32.xlu0 %v235, 64
    %v238 = vpop.permute.xlu0 %237
    %v240 = vadd.f32 %v199, %v238
    %v241 = vtanh.pop %v240
    %v242 = vsub.f32 0.0, %v241
    %244 = vrot.lane.b32.xlu0 %v242, 96
    %v245 = vpop.permute.xlu0 %244
    %v247 = vmul.f32 %v225, %v245
    %249 = vrot.lane.b32.xlu0 %v247, 32
    %v250 = vpop.permute.xlu0 %249
    %v252 = vadd.f32 %v241, %v250
    %253 = vmatpush.msra.mxu0 0.0
    %254 = vmatpush.msra.mxu0 0.0
    %255 = vmatpush.msra.mxu0 0.0
    %256 = vmatpush.msra.mxu0 0.0
    %257 = vmatpush.msra.mxu0 0.0
    %258 = vmatpush.msra.mxu0 0.0
    %259 = vmatpush.msra.mxu0 0.0
    %260 = vmatpush.msra.mxu0 0.0
    %261 = vmatpush.msra.mxu0 0.0
    %262 = vmatpush.msra.mxu0 0.0
    %263 = vmatpush.msra.mxu0 0.0
    %264 = vmatpush.msra.mxu0 0.0
    %265 = vmatpush.msra.mxu0 %v33
    %266 = vmatpush.msra.mxu0 %v32
    %267 = vmatpush.msra.mxu0 %v31
    %268 = vmatpush.msra.mxu0 %v30
    %269 = vmatmul.f32.gmra.mxu0 %v179
    %v270 = vpop.f32.mrf.mxu0
    %v271 = vadd.f32 0.0, %v270
    %272 = vdwg.mxu0
    %v274 = vrot.slane %v271, 7
    %v277 = vadd.f32 %v80, %v274
    %v278 = vadd.f32 %v83, %v271
    %v279 = vmul.f32 %v277, 0.5
    %v280 = vmul.f32 %v278, 0.5
    %v281 = vtanh.pop %v279
    %v282 = vtanh.pop %v280
    %v283 = vmul.f32 %v281, 0.5
    %v284 = vmul.f32 %v282, 0.5
    %v285 = vadd.f32 %v283, 0.5
    %v286 = vadd.f32 %v284, 0.5
    %v287 = vadd.f32 %v271, %v125
    %v289 = vrot.slane %v287, 7
    %290 = vrot.lane.b32.xlu0 %v289, 64
    %v291 = vpop.permute.xlu0 %290
    %292 = vrot.lane.b32.xlu0 %v287, 64
    %v293 = vpop.permute.xlu0 %292
    %v296 = vmul.f32 %v285, %v291
    %v297 = vmul.f32 %v286, %v293
    %300 = vrot.lane.b32.xlu0 %v296, 64
    %v301 = vpop.permute.xlu0 %300
    %302 = vrot.lane.b32.xlu0 %v297, 64
    %v303 = vpop.permute.xlu0 %302
    %v306 = vadd.f32 %v80, %v301
    %v307 = vadd.f32 %v83, %v303
    %v308 = vtanh.pop %v306
    %v309 = vtanh.pop %v307
    %v312 = vrot.slane %v308, 1
    %v313 = vrot.slane %v309, 1
    %v316 = vsub.f32 %v170, %v312
    %v317 = vsub.f32 %v171, %v313
    %v320 = vrot.slane %v316, 7
    %v321 = vrot.slane %v317, 7
    %322 = vrot.lane.b32.xlu0 %v320, 96
    %v323 = vpop.permute.xlu0 %322
    %324 = vrot.lane.b32.xlu0 %v321, 96
    %v325 = vpop.permute.xlu0 %324
    %v328 = vmul.f32 %v285, %v323
    %v329 = vmul.f32 %v286, %v325
    %332 = vrot.lane.b32.xlu0 %v328, 32
    %v333 = vpop.permute.xlu0 %332
    %334 = vrot.lane.b32.xlu0 %v329, 32
    %v335 = vpop.permute.xlu0 %334
    %v338 = vadd.f32 %v308, %v333
    %v339 = vadd.f32 %v309, %v335
    %v342 = vrot.slane %v338, 1
    %v343 = vsel %vm175, %v339, %v342
    %344 = vrot.lane.b32.xlu0 %v343, 64
    %v345 = vpop.permute.xlu0 %344
    %v346 = vsel %vm85, %v345, 0
    %348 = vmatpush.msra.mxu0 0.0
    %349 = vmatpush.msra.mxu0 0.0
    %350 = vmatpush.msra.mxu0 0.0
    %351 = vmatpush.msra.mxu0 0.0
    %352 = vmatpush.msra.mxu0 0.0
    %353 = vmatpush.msra.mxu0 0.0
    %354 = vmatpush.msra.mxu0 0.0
    %355 = vmatpush.msra.mxu0 0.0
    %356 = vmatpush.msra.mxu0 0.0
    %357 = vmatpush.msra.mxu0 0.0
    %358 = vmatpush.msra.mxu0 0.0
    %359 = vmatpush.msra.mxu0 0.0
    %360 = vmatpush.msra.mxu0 %v37
    %361 = vmatpush.msra.mxu0 %v36
    %362 = vmatpush.msra.mxu0 %v35
    %363 = vmatpush.msra.mxu0 %v34
    %364 = vmatmul.f32.gmra.mxu0 %v346
    %v365 = vpop.f32.mrf.mxu0
    %v366 = vadd.f32 %v49, %v365
    %367 = vdwg.mxu0
    %369 = vrot.lane.b32.xlu0 %v252, 64
    %v370 = vpop.permute.xlu0 %369
    %v371 = vsel %vm85, %v370, 0
    %373 = vmatpush.msra.mxu0 0.0
    %374 = vmatpush.msra.mxu0 0.0
    %375 = vmatpush.msra.mxu0 0.0
    %376 = vmatpush.msra.mxu0 0.0
    %377 = vmatpush.msra.mxu0 0.0
    %378 = vmatpush.msra.mxu0 0.0
    %379 = vmatpush.msra.mxu0 0.0
    %380 = vmatpush.msra.mxu0 0.0
    %381 = vmatpush.msra.mxu0 0.0
    %382 = vmatpush.msra.mxu0 0.0
    %383 = vmatpush.msra.mxu0 0.0
    %384 = vmatpush.msra.mxu0 0.0
    %385 = vmatpush.msra.mxu0 %v41
    %386 = vmatpush.msra.mxu0 %v40
    %387 = vmatpush.msra.mxu0 %v39
    %388 = vmatpush.msra.mxu0 %v38
    %389 = vmatmul.f32.gmra.mxu0 %v371
    %v390 = vpop.f32.mrf.mxu0
    %v391 = vadd.f32 0.0, %v390
    %392 = vdwg.mxu0
    %v393 = vadd.f32 %v366, %v391
    %v394 = vmul.f32 %v393, 0.5
    %v395 = vtanh.pop %v394
    %v396 = vmul.f32 %v395, 0.5
    %v397 = vadd.f32 %v396, 0.5
    %v398 = vadd.f32 %v391, %v228
    %400 = vrot.lane.b32.xlu0 %v398, 64
    %v401 = vpop.permute.xlu0 %400
    %v403 = vmul.f32 %v397, %v401
    %405 = vrot.lane.b32.xlu0 %v403, 64
    %v406 = vpop.permute.xlu0 %405
    %v408 = vadd.f32 %v366, %v406
    %v409 = vtanh.pop %v408
    %v410 = vsub.f32 %v252, %v409
    %412 = vrot.lane.b32.xlu0 %v410, 96
    %v413 = vpop.permute.xlu0 %412
    %v415 = vmul.f32 %v397, %v413
    %417 = vrot.lane.b32.xlu0 %v415, 32
    %v418 = vpop.permute.xlu0 %417
    %v420 = vadd.f32 %v409, %v418
    %421 = vmatpush.msra.mxu0 0.0
    %422 = vmatpush.msra.mxu0 0.0
    %423 = vmatpush.msra.mxu0 0.0
    %424 = vmatpush.msra.mxu0 0.0
    %425 = vmatpush.msra.mxu0 0.0
    %426 = vmatpush.msra.mxu0 0.0
    %427 = vmatpush.msra.mxu0 0.0
    %428 = vmatpush.msra.mxu0 0.0
    %429 = vmatpush.msra.mxu0 0.0
    %430 = vmatpush.msra.mxu0 0.0
    %431 = vmatpush.msra.mxu0 0.0
    %432 = vmatpush.msra.mxu0 0.0
    %433 = vmatpush.msra.mxu0 %v33
    %434 = vmatpush.msra.mxu0 %v32
    %435 = vmatpush.msra.mxu0 %v31
    %436 = vmatpush.msra.mxu0 %v30
    %437 = vmatmul.f32.gmra.mxu0 %v346
    %v438 = vpop.f32.mrf.mxu0
    %v439 = vadd.f32 0.0, %v438
    %440 = vdwg.mxu0
    %v442 = vrot.slane %v439, 6
    %v443 = vrot.slane %v439, 7
    %v446 = vadd.f32 %v80, %v442
    %v447 = vadd.f32 %v83, %v443
    %v448 = vmul.f32 %v446, 0.5
    %v449 = vmul.f32 %v447, 0.5
    %v450 = vtanh.pop %v448
    %v451 = vtanh.pop %v449
    %v452 = vmul.f32 %v450, 0.5
    %v453 = vmul.f32 %v451, 0.5
    %v454 = vadd.f32 %v452, 0.5
    %v455 = vadd.f32 %v453, 0.5
    %v456 = vadd.f32 %v439, %v125
    %v458 = vrot.slane %v456, 6
    %v459 = vrot.slane %v456, 7
    %460 = vrot.lane.b32.xlu0 %v458, 64
    %v461 = vpop.permute.xlu0 %460
    %462 = vrot.lane.b32.xlu0 %v459, 64
    %v463 = vpop.permute.xlu0 %462
    %v466 = vmul.f32 %v454, %v461
    %v467 = vmul.f32 %v455, %v463
    %470 = vrot.lane.b32.xlu0 %v466, 64
    %v471 = vpop.permute.xlu0 %470
    %472 = vrot.lane.b32.xlu0 %v467, 64
    %v473 = vpop.permute.xlu0 %472
    %v476 = vadd.f32 %v80, %v471
    %v477 = vadd.f32 %v83, %v473
    %v478 = vtanh.pop %v476
    %v479 = vtanh.pop %v477
    %v482 = vrot.slane %v478, 1
    %v483 = vrot.slane %v479, 1
    %v486 = vsub.f32 %v338, %v482
    %v487 = vsub.f32 %v339, %v483
    %v490 = vrot.slane %v486, 7
    %v491 = vrot.slane %v487, 7
    %492 = vrot.lane.b32.xlu0 %v490, 96
    %v493 = vpop.permute.xlu0 %492
    %494 = vrot.lane.b32.xlu0 %v491, 96
    %v495 = vpop.permute.xlu0 %494
    %v498 = vmul.f32 %v454, %v493
    %v499 = vmul.f32 %v455, %v495
    %502 = vrot.lane.b32.xlu0 %v498, 32
    %v503 = vpop.permute.xlu0 %502
    %504 = vrot.lane.b32.xlu0 %v499, 32
    %v505 = vpop.permute.xlu0 %504
    %v508 = vadd.f32 %v478, %v503
    %v509 = vadd.f32 %v479, %v505
    %v512 = vrot.slane %v508, 2
    %v513 = vrot.slane %v509, 1
    %v514 = vsel %vm175, %v513, %v512
    %515 = vrot.lane.b32.xlu0 %v514, 64
    %v516 = vpop.permute.xlu0 %515
    %v517 = vsel %vm85, %v516, 0
    %519 = vmatpush.msra.mxu0 0.0
    %520 = vmatpush.msra.mxu0 0.0
    %521 = vmatpush.msra.mxu0 0.0
    %522 = vmatpush.msra.mxu0 0.0
    %523 = vmatpush.msra.mxu0 0.0
    %524 = vmatpush.msra.mxu0 0.0
    %525 = vmatpush.msra.mxu0 0.0
    %526 = vmatpush.msra.mxu0 0.0
    %527 = vmatpush.msra.mxu0 0.0
    %528 = vmatpush.msra.mxu0 0.0
    %529 = vmatpush.msra.mxu0 0.0
    %530 = vmatpush.msra.mxu0 0.0
    %531 = vmatpush.msra.mxu0 %v37
    %532 = vmatpush.msra.mxu0 %v36
    %533 = vmatpush.msra.mxu0 %v35
    %534 = vmatpush.msra.mxu0 %v34
    %535 = vmatmul.f32.gmra.mxu0 %v517
    %v536 = vpop.f32.mrf.mxu0
    %v537 = vadd.f32 %v49, %v536
    %538 = vdwg.mxu0
    %540 = vrot.lane.b32.xlu0 %v420, 64
    %v541 = vpop.permute.xlu0 %540
    %v542 = vsel %vm85, %v541, 0
    %544 = vmatpush.msra.mxu0 0.0
    %545 = vmatpush.msra.mxu0 0.0
    %546 = vmatpush.msra.mxu0 0.0
    %547 = vmatpush.msra.mxu0 0.0
    %548 = vmatpush.msra.mxu0 0.0
    %549 = vmatpush.msra.mxu0 0.0
    %550 = vmatpush.msra.mxu0 0.0
    %551 = vmatpush.msra.mxu0 0.0
    %552 = vmatpush.msra.mxu0 0.0
    %553 = vmatpush.msra.mxu0 0.0
    %554 = vmatpush.msra.mxu0 0.0
    %555 = vmatpush.msra.mxu0 0.0
    %556 = vmatpush.msra.mxu0 %v41
    %557 = vmatpush.msra.mxu0 %v40
    %558 = vmatpush.msra.mxu0 %v39
    %559 = vmatpush.msra.mxu0 %v38
    %560 = vmatmul.f32.gmra.mxu0 %v542
    %v561 = vpop.f32.mrf.mxu0
    %v562 = vadd.f32 0.0, %v561
    %563 = vdwg.mxu0
    %v564 = vadd.f32 %v537, %v562
    %v565 = vmul.f32 %v564, 0.5
    %v566 = vtanh.pop %v565
    %v567 = vmul.f32 %v566, 0.5
    %v568 = vadd.f32 %v567, 0.5
    %v569 = vadd.f32 %v562, %v228
    %571 = vrot.lane.b32.xlu0 %v569, 64
    %v572 = vpop.permute.xlu0 %571
    %v574 = vmul.f32 %v568, %v572
    %576 = vrot.lane.b32.xlu0 %v574, 64
    %v577 = vpop.permute.xlu0 %576
    %v579 = vadd.f32 %v537, %v577
    %v580 = vtanh.pop %v579
    %v581 = vsub.f32 %v420, %v580
    %583 = vrot.lane.b32.xlu0 %v581, 96
    %v584 = vpop.permute.xlu0 %583
    %v586 = vmul.f32 %v568, %v584
    %588 = vrot.lane.b32.xlu0 %v586, 32
    %v589 = vpop.permute.xlu0 %588
    %v591 = vadd.f32 %v580, %v589
    %592 = vmatpush.msra.mxu0 0.0
    %593 = vmatpush.msra.mxu0 0.0
    %594 = vmatpush.msra.mxu0 0.0
    %595 = vmatpush.msra.mxu0 0.0
    %596 = vmatpush.msra.mxu0 0.0
    %597 = vmatpush.msra.mxu0 0.0
    %598 = vmatpush.msra.mxu0 0.0
    %599 = vmatpush.msra.mxu0 0.0
    %600 = vmatpush.msra.mxu0 0.0
    %601 = vmatpush.msra.mxu0 0.0
    %602 = vmatpush.msra.mxu0 0.0
    %603 = vmatpush.msra.mxu0 0.0
    %604 = vmatpush.msra.mxu0 %v33
    %605 = vmatpush.msra.mxu0 %v32
    %606 = vmatpush.msra.mxu0 %v31
    %607 = vmatpush.msra.mxu0 %v30
    %608 = vmatmul.f32.gmra.mxu0 %v517
    %v609 = vpop.f32.mrf.mxu0
    %v610 = vadd.f32 0.0, %v609
    %611 = vdwg.mxu0
    %v613 = vrot.slane %v610, 5
    %v614 = vrot.slane %v610, 6
    %v617 = vadd.f32 %v80, %v613
    %v618 = vadd.f32 %v83, %v614
    %v619 = vmul.f32 %v617, 0.5
    %v620 = vmul.f32 %v618, 0.5
    %v621 = vtanh.pop %v619
    %v622 = vtanh.pop %v620
    %v623 = vmul.f32 %v621, 0.5
    %v624 = vmul.f32 %v622, 0.5
    %v625 = vadd.f32 %v623, 0.5
    %v626 = vadd.f32 %v624, 0.5
    %v627 = vadd.f32 %v610, %v125
    %v629 = vrot.slane %v627, 5
    %v630 = vrot.slane %v627, 6
    %631 = vrot.lane.b32.xlu0 %v629, 64
    %v632 = vpop.permute.xlu0 %631
    %633 = vrot.lane.b32.xlu0 %v630, 64
    %v634 = vpop.permute.xlu0 %633
    %v637 = vmul.f32 %v625, %v632
    %v638 = vmul.f32 %v626, %v634
    %641 = vrot.lane.b32.xlu0 %v637, 64
    %v642 = vpop.permute.xlu0 %641
    %643 = vrot.lane.b32.xlu0 %v638, 64
    %v644 = vpop.permute.xlu0 %643
    %v647 = vadd.f32 %v80, %v642
    %v648 = vadd.f32 %v83, %v644
    %v649 = vtanh.pop %v647
    %v650 = vtanh.pop %v648
    %v653 = vrot.slane %v649, 1
    %v654 = vrot.slane %v650, 1
    %v657 = vsub.f32 %v508, %v653
    %v658 = vsub.f32 %v509, %v654
    %v661 = vrot.slane %v657, 7
    %v662 = vrot.slane %v658, 7
    %663 = vrot.lane.b32.xlu0 %v661, 96
    %v664 = vpop.permute.xlu0 %663
    %665 = vrot.lane.b32.xlu0 %v662, 96
    %v666 = vpop.permute.xlu0 %665
    %v669 = vmul.f32 %v625, %v664
    %v670 = vmul.f32 %v626, %v666
    %673 = vrot.lane.b32.xlu0 %v669, 32
    %v674 = vpop.permute.xlu0 %673
    %675 = vrot.lane.b32.xlu0 %v670, 32
    %v676 = vpop.permute.xlu0 %675
    %v679 = vadd.f32 %v649, %v674
    %v680 = vadd.f32 %v650, %v676
    %v683 = vrot.slane %v679, 3
    %v684 = vrot.slane %v680, 2
    %v685 = vsel %vm175, %v684, %v683
    %686 = vrot.lane.b32.xlu0 %v685, 64
    %v687 = vpop.permute.xlu0 %686
    %v688 = vsel %vm85, %v687, 0
    %690 = vmatpush.msra.mxu0 0.0
    %691 = vmatpush.msra.mxu0 0.0
    %692 = vmatpush.msra.mxu0 0.0
    %693 = vmatpush.msra.mxu0 0.0
    %694 = vmatpush.msra.mxu0 0.0
    %695 = vmatpush.msra.mxu0 0.0
    %696 = vmatpush.msra.mxu0 0.0
    %697 = vmatpush.msra.mxu0 0.0
    %698 = vmatpush.msra.mxu0 0.0
    %699 = vmatpush.msra.mxu0 0.0
    %700 = vmatpush.msra.mxu0 0.0
    %701 = vmatpush.msra.mxu0 0.0
    %702 = vmatpush.msra.mxu0 %v37
    %703 = vmatpush.msra.mxu0 %v36
    %704 = vmatpush.msra.mxu0 %v35
    %705 = vmatpush.msra.mxu0 %v34
    %706 = vmatmul.f32.gmra.mxu0 %v688
    %v707 = vpop.f32.mrf.mxu0
    %v708 = vadd.f32 %v49, %v707
    %709 = vdwg.mxu0
    %711 = vrot.lane.b32.xlu0 %v591, 64
    %v712 = vpop.permute.xlu0 %711
    %v713 = vsel %vm85, %v712, 0
    %715 = vmatpush.msra.mxu0 0.0
    %716 = vmatpush.msra.mxu0 0.0
    %717 = vmatpush.msra.mxu0 0.0
    %718 = vmatpush.msra.mxu0 0.0
    %719 = vmatpush.msra.mxu0 0.0
    %720 = vmatpush.msra.mxu0 0.0
    %721 = vmatpush.msra.mxu0 0.0
    %722 = vmatpush.msra.mxu0 0.0
    %723 = vmatpush.msra.mxu0 0.0
    %724 = vmatpush.msra.mxu0 0.0
    %725 = vmatpush.msra.mxu0 0.0
    %726 = vmatpush.msra.mxu0 0.0
    %727 = vmatpush.msra.mxu0 %v41
    %728 = vmatpush.msra.mxu0 %v40
    %729 = vmatpush.msra.mxu0 %v39
    %730 = vmatpush.msra.mxu0 %v38
    %731 = vmatmul.f32.gmra.mxu0 %v713
    %v732 = vpop.f32.mrf.mxu0
    %v733 = vadd.f32 0.0, %v732
    %734 = vdwg.mxu0
    %v735 = vadd.f32 %v708, %v733
    %v736 = vmul.f32 %v735, 0.5
    %v737 = vtanh.pop %v736
    %v738 = vmul.f32 %v737, 0.5
    %v739 = vadd.f32 %v738, 0.5
    %v740 = vadd.f32 %v733, %v228
    %742 = vrot.lane.b32.xlu0 %v740, 64
    %v743 = vpop.permute.xlu0 %742
    %v745 = vmul.f32 %v739, %v743
    %747 = vrot.lane.b32.xlu0 %v745, 64
    %v748 = vpop.permute.xlu0 %747
    %v750 = vadd.f32 %v708, %v748
    %v751 = vtanh.pop %v750
    %v752 = vsub.f32 %v591, %v751
    %754 = vrot.lane.b32.xlu0 %v752, 96
    %v755 = vpop.permute.xlu0 %754
    %v757 = vmul.f32 %v739, %v755
    %759 = vrot.lane.b32.xlu0 %v757, 32
    %v760 = vpop.permute.xlu0 %759
    %v762 = vadd.f32 %v751, %v760
    %763 = vmatpush.msra.mxu0 0.0
    %764 = vmatpush.msra.mxu0 0.0
    %765 = vmatpush.msra.mxu0 0.0
    %766 = vmatpush.msra.mxu0 0.0
    %767 = vmatpush.msra.mxu0 0.0
    %768 = vmatpush.msra.mxu0 0.0
    %769 = vmatpush.msra.mxu0 0.0
    %770 = vmatpush.msra.mxu0 0.0
    %771 = vmatpush.msra.mxu0 0.0
    %772 = vmatpush.msra.mxu0 0.0
    %773 = vmatpush.msra.mxu0 0.0
    %774 = vmatpush.msra.mxu0 0.0
    %775 = vmatpush.msra.mxu0 %v33
    %776 = vmatpush.msra.mxu0 %v32
    %777 = vmatpush.msra.mxu0 %v31
    %778 = vmatpush.msra.mxu0 %v30
    %779 = vmatmul.f32.gmra.mxu0 %v688
    %v780 = vpop.f32.mrf.mxu0
    %v781 = vadd.f32 0.0, %v780
    %782 = vdwg.mxu0
    %v784 = vrot.slane %v781, 4
    %v785 = vrot.slane %v781, 5
    %v788 = vadd.f32 %v80, %v784
    %v789 = vadd.f32 %v83, %v785
    %v790 = vmul.f32 %v788, 0.5
    %v791 = vmul.f32 %v789, 0.5
    %v792 = vtanh.pop %v790
    %v793 = vtanh.pop %v791
    %v794 = vmul.f32 %v792, 0.5
    %v795 = vmul.f32 %v793, 0.5
    %v796 = vadd.f32 %v794, 0.5
    %v797 = vadd.f32 %v795, 0.5
    %v798 = vadd.f32 %v781, %v125
    %v800 = vrot.slane %v798, 4
    %v801 = vrot.slane %v798, 5
    %802 = vrot.lane.b32.xlu0 %v800, 64
    %v803 = vpop.permute.xlu0 %802
    %804 = vrot.lane.b32.xlu0 %v801, 64
    %v805 = vpop.permute.xlu0 %804
    %v808 = vmul.f32 %v796, %v803
    %v809 = vmul.f32 %v797, %v805
    %812 = vrot.lane.b32.xlu0 %v808, 64
    %v813 = vpop.permute.xlu0 %812
    %814 = vrot.lane.b32.xlu0 %v809, 64
    %v815 = vpop.permute.xlu0 %814
    %v818 = vadd.f32 %v80, %v813
    %v819 = vadd.f32 %v83, %v815
    %v820 = vtanh.pop %v818
    %v821 = vtanh.pop %v819
    %v824 = vrot.slane %v820, 1
    %v825 = vrot.slane %v821, 1
    %v828 = vsub.f32 %v679, %v824
    %v829 = vsub.f32 %v680, %v825
    %v832 = vrot.slane %v828, 7
    %v833 = vrot.slane %v829, 7
    %834 = vrot.lane.b32.xlu0 %v832, 96
    %v835 = vpop.permute.xlu0 %834
    %836 = vrot.lane.b32.xlu0 %v833, 96
    %v837 = vpop.permute.xlu0 %836
    %v840 = vmul.f32 %v796, %v835
    %v841 = vmul.f32 %v797, %v837
    %844 = vrot.lane.b32.xlu0 %v840, 32
    %v845 = vpop.permute.xlu0 %844
    %846 = vrot.lane.b32.xlu0 %v841, 32
    %v847 = vpop.permute.xlu0 %846
    %v850 = vadd.f32 %v820, %v845
    %v851 = vadd.f32 %v821, %v847
    %v854 = vrot.slane %v850, 4
    %v855 = vrot.slane %v851, 3
    %v856 = vsel %vm175, %v855, %v854
    %857 = vrot.lane.b32.xlu0 %v856, 64
    %v858 = vpop.permute.xlu0 %857
    %v859 = vsel %vm85, %v858, 0
    %861 = vmatpush.msra.mxu0 0.0
    %862 = vmatpush.msra.mxu0 0.0
    %863 = vmatpush.msra.mxu0 0.0
    %864 = vmatpush.msra.mxu0 0.0
    %865 = vmatpush.msra.mxu0 0.0
    %866 = vmatpush.msra.mxu0 0.0
    %867 = vmatpush.msra.mxu0 0.0
    %868 = vmatpush.msra.mxu0 0.0
    %869 = vmatpush.msra.mxu0 0.0
    %870 = vmatpush.msra.mxu0 0.0
    %871 = vmatpush.msra.mxu0 0.0
    %872 = vmatpush.msra.mxu0 0.0
    %873 = vmatpush.msra.mxu0 %v37
    %874 = vmatpush.msra.mxu0 %v36
    %875 = vmatpush.msra.mxu0 %v35
    %876 = vmatpush.msra.mxu0 %v34
    %877 = vmatmul.f32.gmra.mxu0 %v859
    %v878 = vpop.f32.mrf.mxu0
    %v879 = vadd.f32 %v49, %v878
    %880 = vdwg.mxu0
    %882 = vrot.lane.b32.xlu0 %v762, 64
    %v883 = vpop.permute.xlu0 %882
    %v884 = vsel %vm85, %v883, 0
    %886 = vmatpush.msra.mxu0 0.0
    %887 = vmatpush.msra.mxu0 0.0
    %888 = vmatpush.msra.mxu0 0.0
    %889 = vmatpush.msra.mxu0 0.0
    %890 = vmatpush.msra.mxu0 0.0
    %891 = vmatpush.msra.mxu0 0.0
    %892 = vmatpush.msra.mxu0 0.0
    %893 = vmatpush.msra.mxu0 0.0
    %894 = vmatpush.msra.mxu0 0.0
    %895 = vmatpush.msra.mxu0 0.0
    %896 = vmatpush.msra.mxu0 0.0
    %897 = vmatpush.msra.mxu0 0.0
    %898 = vmatpush.msra.mxu0 %v41
    %899 = vmatpush.msra.mxu0 %v40
    %900 = vmatpush.msra.mxu0 %v39
    %901 = vmatpush.msra.mxu0 %v38
    %902 = vmatmul.f32.gmra.mxu0 %v884
    %v903 = vpop.f32.mrf.mxu0
    %v904 = vadd.f32 0.0, %v903
    %905 = vdwg.mxu0
    %v906 = vadd.f32 %v879, %v904
    %v907 = vmul.f32 %v906, 0.5
    %v908 = vtanh.pop %v907
    %v909 = vmul.f32 %v908, 0.5
    %v910 = vadd.f32 %v909, 0.5
    %v911 = vadd.f32 %v904, %v228
    %913 = vrot.lane.b32.xlu0 %v911, 64
    %v914 = vpop.permute.xlu0 %913
    %v916 = vmul.f32 %v910, %v914
    %918 = vrot.lane.b32.xlu0 %v916, 64
    %v919 = vpop.permute.xlu0 %918
    %v921 = vadd.f32 %v879, %v919
    %v922 = vtanh.pop %v921
    %v923 = vsub.f32 %v762, %v922
    %925 = vrot.lane.b32.xlu0 %v923, 96
    %v926 = vpop.permute.xlu0 %925
    %v928 = vmul.f32 %v910, %v926
    %930 = vrot.lane.b32.xlu0 %v928, 32
    %v931 = vpop.permute.xlu0 %930
    %v933 = vadd.f32 %v922, %v931
    %934 = vmatpush.msra.mxu0 0.0
    %935 = vmatpush.msra.mxu0 0.0
    %936 = vmatpush.msra.mxu0 0.0
    %937 = vmatpush.msra.mxu0 0.0
    %938 = vmatpush.msra.mxu0 0.0
    %939 = vmatpush.msra.mxu0 0.0
    %940 = vmatpush.msra.mxu0 0.0
    %941 = vmatpush.msra.mxu0 0.0
    %942 = vmatpush.msra.mxu0 0.0
    %943 = vmatpush.msra.mxu0 0.0
    %944 = vmatpush.msra.mxu0 0.0
    %945 = vmatpush.msra.mxu0 0.0
    %946 = vmatpush.msra.mxu0 %v33
    %947 = vmatpush.msra.mxu0 %v32
    %948 = vmatpush.msra.mxu0 %v31
    %949 = vmatpush.msra.mxu0 %v30
    %950 = vmatmul.f32.gmra.mxu0 %v859
    %v951 = vpop.f32.mrf.mxu0
    %v952 = vadd.f32 0.0, %v951
    %953 = vdwg.mxu0
    %v955 = vrot.slane %v952, 3
    %v956 = vrot.slane %v952, 4
    %v959 = vadd.f32 %v80, %v955
    %v960 = vadd.f32 %v83, %v956
    %v961 = vmul.f32 %v959, 0.5
    %v962 = vmul.f32 %v960, 0.5
    %v963 = vtanh.pop %v961
    %v964 = vtanh.pop %v962
    %v965 = vmul.f32 %v963, 0.5
    %v966 = vmul.f32 %v964, 0.5
    %v967 = vadd.f32 %v965, 0.5
    %v968 = vadd.f32 %v966, 0.5
    %v969 = vadd.f32 %v952, %v125
    %v971 = vrot.slane %v969, 3
    %v972 = vrot.slane %v969, 4
    %973 = vrot.lane.b32.xlu0 %v971, 64
    %v974 = vpop.permute.xlu0 %973
    %975 = vrot.lane.b32.xlu0 %v972, 64
    %v976 = vpop.permute.xlu0 %975
    %v979 = vmul.f32 %v967, %v974
    %v980 = vmul.f32 %v968, %v976
    %983 = vrot.lane.b32.xlu0 %v979, 64
    %v984 = vpop.permute.xlu0 %983
    %985 = vrot.lane.b32.xlu0 %v980, 64
    %v986 = vpop.permute.xlu0 %985
    %v989 = vadd.f32 %v80, %v984
    %v990 = vadd.f32 %v83, %v986
    %v991 = vtanh.pop %v989
    %v992 = vtanh.pop %v990
    %v995 = vrot.slane %v991, 1
    %v996 = vrot.slane %v992, 1
    %v999 = vsub.f32 %v850, %v995
    %v1000 = vsub.f32 %v851, %v996
    %v1003 = vrot.slane %v999, 7
    %v1004 = vrot.slane %v1000, 7
    %1005 = vrot.lane.b32.xlu0 %v1003, 96
    %v1006 = vpop.permute.xlu0 %1005
    %1007 = vrot.lane.b32.xlu0 %v1004, 96
    %v1008 = vpop.permute.xlu0 %1007
    %v1011 = vmul.f32 %v967, %v1006
    %v1012 = vmul.f32 %v968, %v1008
    %1015 = vrot.lane.b32.xlu0 %v1011, 32
    %v1016 = vpop.permute.xlu0 %1015
    %1017 = vrot.lane.b32.xlu0 %v1012, 32
    %v1018 = vpop.permute.xlu0 %1017
    %v1021 = vadd.f32 %v991, %v1016
    %v1022 = vadd.f32 %v992, %v1018
    %v1025 = vrot.slane %v1021, 5
    %v1026 = vrot.slane %v1022, 4
    %v1027 = vsel %vm175, %v1026, %v1025
    %1028 = vrot.lane.b32.xlu0 %v1027, 64
    %v1029 = vpop.permute.xlu0 %1028
    %v1030 = vsel %vm85, %v1029, 0
    %1032 = vmatpush.msra.mxu0 0.0
    %1033 = vmatpush.msra.mxu0 0.0
    %1034 = vmatpush.msra.mxu0 0.0
    %1035 = vmatpush.msra.mxu0 0.0
    %1036 = vmatpush.msra.mxu0 0.0
    %1037 = vmatpush.msra.mxu0 0.0
    %1038 = vmatpush.msra.mxu0 0.0
    %1039 = vmatpush.msra.mxu0 0.0
    %1040 = vmatpush.msra.mxu0 0.0
    %1041 = vmatpush.msra.mxu0 0.0
    %1042 = vmatpush.msra.mxu0 0.0
    %1043 = vmatpush.msra.mxu0 0.0
    %1044 = vmatpush.msra.mxu0 %v37
    %1045 = vmatpush.msra.mxu0 %v36
    %1046 = vmatpush.msra.mxu0 %v35
    %1047 = vmatpush.msra.mxu0 %v34
    %1048 = vmatmul.f32.gmra.mxu0 %v1030
    %v1049 = vpop.f32.mrf.mxu0
    %v1050 = vadd.f32 %v49, %v1049
    %1051 = vdwg.mxu0
    %1053 = vrot.lane.b32.xlu0 %v933, 64
    %v1054 = vpop.permute.xlu0 %1053
    %v1055 = vsel %vm85, %v1054, 0
    %1057 = vmatpush.msra.mxu0 0.0
    %1058 = vmatpush.msra.mxu0 0.0
    %1059 = vmatpush.msra.mxu0 0.0
    %1060 = vmatpush.msra.mxu0 0.0
    %1061 = vmatpush.msra.mxu0 0.0
    %1062 = vmatpush.msra.mxu0 0.0
    %1063 = vmatpush.msra.mxu0 0.0
    %1064 = vmatpush.msra.mxu0 0.0
    %1065 = vmatpush.msra.mxu0 0.0
    %1066 = vmatpush.msra.mxu0 0.0
    %1067 = vmatpush.msra.mxu0 0.0
    %1068 = vmatpush.msra.mxu0 0.0
    %1069 = vmatpush.msra.mxu0 %v41
    %1070 = vmatpush.msra.mxu0 %v40
    %1071 = vmatpush.msra.mxu0 %v39
    %1072 = vmatpush.msra.mxu0 %v38
    %1073 = vmatmul.f32.gmra.mxu0 %v1055
    %v1074 = vpop.f32.mrf.mxu0
    %v1075 = vadd.f32 0.0, %v1074
    %1076 = vdwg.mxu0
    %v1077 = vadd.f32 %v1050, %v1075
    %v1078 = vmul.f32 %v1077, 0.5
    %v1079 = vtanh.pop %v1078
    %v1080 = vmul.f32 %v1079, 0.5
    %v1081 = vadd.f32 %v1080, 0.5
    %v1082 = vadd.f32 %v1075, %v228
    %1084 = vrot.lane.b32.xlu0 %v1082, 64
    %v1085 = vpop.permute.xlu0 %1084
    %v1087 = vmul.f32 %v1081, %v1085
    %1089 = vrot.lane.b32.xlu0 %v1087, 64
    %v1090 = vpop.permute.xlu0 %1089
    %v1092 = vadd.f32 %v1050, %v1090
    %v1093 = vtanh.pop %v1092
    %v1094 = vsub.f32 %v933, %v1093
    %1096 = vrot.lane.b32.xlu0 %v1094, 96
    %v1097 = vpop.permute.xlu0 %1096
    %v1099 = vmul.f32 %v1081, %v1097
    %1101 = vrot.lane.b32.xlu0 %v1099, 32
    %v1102 = vpop.permute.xlu0 %1101
    %v1104 = vadd.f32 %v1093, %v1102
    %1105 = vmatpush.msra.mxu0 0.0
    %1106 = vmatpush.msra.mxu0 0.0
    %1107 = vmatpush.msra.mxu0 0.0
    %1108 = vmatpush.msra.mxu0 0.0
    %1109 = vmatpush.msra.mxu0 0.0
    %1110 = vmatpush.msra.mxu0 0.0
    %1111 = vmatpush.msra.mxu0 0.0
    %1112 = vmatpush.msra.mxu0 0.0
    %1113 = vmatpush.msra.mxu0 0.0
    %1114 = vmatpush.msra.mxu0 0.0
    %1115 = vmatpush.msra.mxu0 0.0
    %1116 = vmatpush.msra.mxu0 0.0
    %1117 = vmatpush.msra.mxu0 %v33
    %1118 = vmatpush.msra.mxu0 %v32
    %1119 = vmatpush.msra.mxu0 %v31
    %1120 = vmatpush.msra.mxu0 %v30
    %1121 = vmatmul.f32.gmra.mxu0 %v1030
    %v1122 = vpop.f32.mrf.mxu0
    %v1123 = vadd.f32 0.0, %v1122
    %1124 = vdwg.mxu0
    %v1126 = vrot.slane %v1123, 2
    %v1127 = vrot.slane %v1123, 3
    %v1130 = vadd.f32 %v80, %v1126
    %v1131 = vadd.f32 %v83, %v1127
    %v1132 = vmul.f32 %v1130, 0.5
    %v1133 = vmul.f32 %v1131, 0.5
    %v1134 = vtanh.pop %v1132
    %v1135 = vtanh.pop %v1133
    %v1136 = vmul.f32 %v1134, 0.5
    %v1137 = vmul.f32 %v1135, 0.5
    %v1138 = vadd.f32 %v1136, 0.5
    %v1139 = vadd.f32 %v1137, 0.5
    %v1140 = vadd.f32 %v1123, %v125
    %v1142 = vrot.slane %v1140, 2
    %v1143 = vrot.slane %v1140, 3
    %1144 = vrot.lane.b32.xlu0 %v1142, 64
    %v1145 = vpop.permute.xlu0 %1144
    %1146 = vrot.lane.b32.xlu0 %v1143, 64
    %v1147 = vpop.permute.xlu0 %1146
    %v1150 = vmul.f32 %v1138, %v1145
    %v1151 = vmul.f32 %v1139, %v1147
    %1154 = vrot.lane.b32.xlu0 %v1150, 64
    %v1155 = vpop.permute.xlu0 %1154
    %1156 = vrot.lane.b32.xlu0 %v1151, 64
    %v1157 = vpop.permute.xlu0 %1156
    %v1160 = vadd.f32 %v80, %v1155
    %v1161 = vadd.f32 %v83, %v1157
    %v1162 = vtanh.pop %v1160
    %v1163 = vtanh.pop %v1161
    %v1166 = vrot.slane %v1162, 1
    %v1167 = vrot.slane %v1163, 1
    %v1170 = vsub.f32 %v1021, %v1166
    %v1171 = vsub.f32 %v1022, %v1167
    %v1174 = vrot.slane %v1170, 7
    %v1175 = vrot.slane %v1171, 7
    %1176 = vrot.lane.b32.xlu0 %v1174, 96
    %v1177 = vpop.permute.xlu0 %1176
    %1178 = vrot.lane.b32.xlu0 %v1175, 96
    %v1179 = vpop.permute.xlu0 %1178
    %v1182 = vmul.f32 %v1138, %v1177
    %v1183 = vmul.f32 %v1139, %v1179
    %1186 = vrot.lane.b32.xlu0 %v1182, 32
    %v1187 = vpop.permute.xlu0 %1186
    %1188 = vrot.lane.b32.xlu0 %v1183, 32
    %v1189 = vpop.permute.xlu0 %1188
    %v1192 = vadd.f32 %v1162, %v1187
    %v1193 = vadd.f32 %v1163, %v1189
    %v1196 = vrot.slane %v1192, 6
    %v1197 = vrot.slane %v1193, 5
    %v1198 = vsel %vm175, %v1197, %v1196
    %1199 = vrot.lane.b32.xlu0 %v1198, 64
    %v1200 = vpop.permute.xlu0 %1199
    %v1201 = vsel %vm85, %v1200, 0
    %1203 = vmatpush.msra.mxu0 0.0
    %1204 = vmatpush.msra.mxu0 0.0
    %1205 = vmatpush.msra.mxu0 0.0
    %1206 = vmatpush.msra.mxu0 0.0
    %1207 = vmatpush.msra.mxu0 0.0
    %1208 = vmatpush.msra.mxu0 0.0
    %1209 = vmatpush.msra.mxu0 0.0
    %1210 = vmatpush.msra.mxu0 0.0
    %1211 = vmatpush.msra.mxu0 0.0
    %1212 = vmatpush.msra.mxu0 0.0
    %1213 = vmatpush.msra.mxu0 0.0
    %1214 = vmatpush.msra.mxu0 0.0
    %1215 = vmatpush.msra.mxu0 %v37
    %1216 = vmatpush.msra.mxu0 %v36
    %1217 = vmatpush.msra.mxu0 %v35
    %1218 = vmatpush.msra.mxu0 %v34
    %1219 = vmatmul.f32.gmra.mxu0 %v1201
    %v1220 = vpop.f32.mrf.mxu0
    %v1221 = vadd.f32 %v49, %v1220
    %1222 = vdwg.mxu0
    %1224 = vrot.lane.b32.xlu0 %v1104, 64
    %v1225 = vpop.permute.xlu0 %1224
    %v1226 = vsel %vm85, %v1225, 0
    %1228 = vmatpush.msra.mxu0 0.0
    %1229 = vmatpush.msra.mxu0 0.0
    %1230 = vmatpush.msra.mxu0 0.0
    %1231 = vmatpush.msra.mxu0 0.0
    %1232 = vmatpush.msra.mxu0 0.0
    %1233 = vmatpush.msra.mxu0 0.0
    %1234 = vmatpush.msra.mxu0 0.0
    %1235 = vmatpush.msra.mxu0 0.0
    %1236 = vmatpush.msra.mxu0 0.0
    %1237 = vmatpush.msra.mxu0 0.0
    %1238 = vmatpush.msra.mxu0 0.0
    %1239 = vmatpush.msra.mxu0 0.0
    %1240 = vmatpush.msra.mxu0 %v41
    %1241 = vmatpush.msra.mxu0 %v40
    %1242 = vmatpush.msra.mxu0 %v39
    %1243 = vmatpush.msra.mxu0 %v38
    %1244 = vmatmul.f32.gmra.mxu0 %v1226
    %v1245 = vpop.f32.mrf.mxu0
    %v1246 = vadd.f32 0.0, %v1245
    %1247 = vdwg.mxu0
    %v1248 = vadd.f32 %v1221, %v1246
    %v1249 = vmul.f32 %v1248, 0.5
    %v1250 = vtanh.pop %v1249
    %v1251 = vmul.f32 %v1250, 0.5
    %v1252 = vadd.f32 %v1251, 0.5
    %v1253 = vadd.f32 %v1246, %v228
    %1255 = vrot.lane.b32.xlu0 %v1253, 64
    %v1256 = vpop.permute.xlu0 %1255
    %v1258 = vmul.f32 %v1252, %v1256
    %1260 = vrot.lane.b32.xlu0 %v1258, 64
    %v1261 = vpop.permute.xlu0 %1260
    %v1263 = vadd.f32 %v1221, %v1261
    %v1264 = vtanh.pop %v1263
    %v1265 = vsub.f32 %v1104, %v1264
    %1267 = vrot.lane.b32.xlu0 %v1265, 96
    %v1268 = vpop.permute.xlu0 %1267
    %v1270 = vmul.f32 %v1252, %v1268
    %1272 = vrot.lane.b32.xlu0 %v1270, 32
    %v1273 = vpop.permute.xlu0 %1272
    %v1275 = vadd.f32 %v1264, %v1273
    %1276 = vmatpush.msra.mxu0 0.0
    %1277 = vmatpush.msra.mxu0 0.0
    %1278 = vmatpush.msra.mxu0 0.0
    %1279 = vmatpush.msra.mxu0 0.0
    %1280 = vmatpush.msra.mxu0 0.0
    %1281 = vmatpush.msra.mxu0 0.0
    %1282 = vmatpush.msra.mxu0 0.0
    %1283 = vmatpush.msra.mxu0 0.0
    %1284 = vmatpush.msra.mxu0 0.0
    %1285 = vmatpush.msra.mxu0 0.0
    %1286 = vmatpush.msra.mxu0 0.0
    %1287 = vmatpush.msra.mxu0 0.0
    %1288 = vmatpush.msra.mxu0 %v33
    %1289 = vmatpush.msra.mxu0 %v32
    %1290 = vmatpush.msra.mxu0 %v31
    %1291 = vmatpush.msra.mxu0 %v30
    %1292 = vmatmul.f32.gmra.mxu0 %v1201
    %v1293 = vpop.f32.mrf.mxu0
    %v1294 = vadd.f32 0.0, %v1293
    %1295 = vdwg.mxu0
    %v1297 = vrot.slane %v1294, 1
    %v1298 = vrot.slane %v1294, 2
    %v1301 = vadd.f32 %v80, %v1297
    %v1302 = vadd.f32 %v83, %v1298
    %v1303 = vmul.f32 %v1301, 0.5
    %v1304 = vmul.f32 %v1302, 0.5
    %v1305 = vtanh.pop %v1303
    %v1306 = vtanh.pop %v1304
    %v1307 = vmul.f32 %v1305, 0.5
    %v1308 = vmul.f32 %v1306, 0.5
    %v1309 = vadd.f32 %v1307, 0.5
    %v1310 = vadd.f32 %v1308, 0.5
    %v1311 = vadd.f32 %v1294, %v125
    %v1313 = vrot.slane %v1311, 1
    %v1314 = vrot.slane %v1311, 2
    %1315 = vrot.lane.b32.xlu0 %v1313, 64
    %v1316 = vpop.permute.xlu0 %1315
    %1317 = vrot.lane.b32.xlu0 %v1314, 64
    %v1318 = vpop.permute.xlu0 %1317
    %v1321 = vmul.f32 %v1309, %v1316
    %v1322 = vmul.f32 %v1310, %v1318
    %1325 = vrot.lane.b32.xlu0 %v1321, 64
    %v1326 = vpop.permute.xlu0 %1325
    %1327 = vrot.lane.b32.xlu0 %v1322, 64
    %v1328 = vpop.permute.xlu0 %1327
    %v1331 = vadd.f32 %v80, %v1326
    %v1332 = vadd.f32 %v83, %v1328
    %v1333 = vtanh.pop %v1331
    %v1334 = vtanh.pop %v1332
    %v1337 = vrot.slane %v1333, 1
    %v1338 = vrot.slane %v1334, 1
    %v1341 = vsub.f32 %v1192, %v1337
    %v1342 = vsub.f32 %v1193, %v1338
    %v1345 = vrot.slane %v1341, 7
    %v1346 = vrot.slane %v1342, 7
    %1347 = vrot.lane.b32.xlu0 %v1345, 96
    %v1348 = vpop.permute.xlu0 %1347
    %1349 = vrot.lane.b32.xlu0 %v1346, 96
    %v1350 = vpop.permute.xlu0 %1349
    %v1353 = vmul.f32 %v1309, %v1348
    %v1354 = vmul.f32 %v1310, %v1350
    %1357 = vrot.lane.b32.xlu0 %v1353, 32
    %v1358 = vpop.permute.xlu0 %1357
    %1359 = vrot.lane.b32.xlu0 %v1354, 32
    %v1360 = vpop.permute.xlu0 %1359
    %v1363 = vadd.f32 %v1333, %v1358
    %v1364 = vadd.f32 %v1334, %v1360
    %v1367 = vrot.slane %v1363, 7
    %v1368 = vrot.slane %v1364, 6
    %v1369 = vsel %vm175, %v1368, %v1367
    %1370 = vrot.lane.b32.xlu0 %v1369, 64
    %v1371 = vpop.permute.xlu0 %1370
    %v1372 = vsel %vm85, %v1371, 0
    %1374 = vmatpush.msra.mxu0 0.0
    %1375 = vmatpush.msra.mxu0 0.0
    %1376 = vmatpush.msra.mxu0 0.0
    %1377 = vmatpush.msra.mxu0 0.0
    %1378 = vmatpush.msra.mxu0 0.0
    %1379 = vmatpush.msra.mxu0 0.0
    %1380 = vmatpush.msra.mxu0 0.0
    %1381 = vmatpush.msra.mxu0 0.0
    %1382 = vmatpush.msra.mxu0 0.0
    %1383 = vmatpush.msra.mxu0 0.0
    %1384 = vmatpush.msra.mxu0 0.0
    %1385 = vmatpush.msra.mxu0 0.0
    %1386 = vmatpush.msra.mxu0 %v37
    %1387 = vmatpush.msra.mxu0 %v36
    %1388 = vmatpush.msra.mxu0 %v35
    %1389 = vmatpush.msra.mxu0 %v34
    %1390 = vmatmul.f32.gmra.mxu0 %v1372
    %v1391 = vpop.f32.mrf.mxu0
    %v1392 = vadd.f32 %v49, %v1391
    %1393 = vdwg.mxu0
    %1395 = vrot.lane.b32.xlu0 %v1275, 64
    %v1396 = vpop.permute.xlu0 %1395
    %v1397 = vsel %vm85, %v1396, 0
    %1399 = vmatpush.msra.mxu0 0.0
    %1400 = vmatpush.msra.mxu0 0.0
    %1401 = vmatpush.msra.mxu0 0.0
    %1402 = vmatpush.msra.mxu0 0.0
    %1403 = vmatpush.msra.mxu0 0.0
    %1404 = vmatpush.msra.mxu0 0.0
    %1405 = vmatpush.msra.mxu0 0.0
    %1406 = vmatpush.msra.mxu0 0.0
    %1407 = vmatpush.msra.mxu0 0.0
    %1408 = vmatpush.msra.mxu0 0.0
    %1409 = vmatpush.msra.mxu0 0.0
    %1410 = vmatpush.msra.mxu0 0.0
    %1411 = vmatpush.msra.mxu0 %v41
    %1412 = vmatpush.msra.mxu0 %v40
    %1413 = vmatpush.msra.mxu0 %v39
    %1414 = vmatpush.msra.mxu0 %v38
    %1415 = vmatmul.f32.gmra.mxu0 %v1397
    %v1416 = vpop.f32.mrf.mxu0
    %v1417 = vadd.f32 0.0, %v1416
    %1418 = vdwg.mxu0
    %v1419 = vadd.f32 %v1392, %v1417
    %v1420 = vmul.f32 %v1419, 0.5
    %v1421 = vtanh.pop %v1420
    %v1422 = vmul.f32 %v1421, 0.5
    %v1423 = vadd.f32 %v1422, 0.5
    %v1424 = vadd.f32 %v1417, %v228
    %1426 = vrot.lane.b32.xlu0 %v1424, 64
    %v1427 = vpop.permute.xlu0 %1426
    %v1429 = vmul.f32 %v1423, %v1427
    %1431 = vrot.lane.b32.xlu0 %v1429, 64
    %v1432 = vpop.permute.xlu0 %1431
    %v1434 = vadd.f32 %v1392, %v1432
    %v1435 = vtanh.pop %v1434
    %v1436 = vsub.f32 %v1275, %v1435
    %1438 = vrot.lane.b32.xlu0 %v1436, 96
    %v1439 = vpop.permute.xlu0 %1438
    %v1441 = vmul.f32 %v1423, %v1439
    %1443 = vrot.lane.b32.xlu0 %v1441, 32
    %v1444 = vpop.permute.xlu0 %1443
    %v1446 = vadd.f32 %v1435, %v1444
    %v1447 = vperm.slane %v46, 4
    %1449 = vrot.lane.b32.xlu0 %v1446, 64
    %v1450 = vpop.permute.xlu0 %1449
    %v1451 = vsel %vm85, %v1450, 0
    %1453 = vmatpush.msra.mxu0 0.0
    %1454 = vmatpush.msra.mxu0 0.0
    %1455 = vmatpush.msra.mxu0 0.0
    %1456 = vmatpush.msra.mxu0 0.0
    %1457 = vmatpush.msra.mxu0 0.0
    %1458 = vmatpush.msra.mxu0 0.0
    %1459 = vmatpush.msra.mxu0 0.0
    %1460 = vmatpush.msra.mxu0 0.0
    %1461 = vmatpush.msra.mxu0 0.0
    %1462 = vmatpush.msra.mxu0 0.0
    %1463 = vmatpush.msra.mxu0 0.0
    %1464 = vmatpush.msra.mxu0 0.0
    %1465 = vmatpush.msra.mxu0 %v45
    %1466 = vmatpush.msra.mxu0 %v44
    %1467 = vmatpush.msra.mxu0 %v43
    %1468 = vmatpush.msra.mxu0 %v42
    %1469 = vmatmul.f32.gmra.mxu0 %v1451
    %v1470 = vpop.f32.mrf.mxu0
    %v1471 = vadd.f32 %v1447, %v1470
    %1472 = vdwg.mxu0
    %v1473 = vxor.u32 %v1471, 2147483648
    %v1474 = vmul.f32 %v1473, 1.442695
    %v1475 = vpow.pop %v1474
    %v1476 = vadd.f32 %v1475, 1.0
    %v1477 = vrcp.pop %v1476
    %v1478 = vmul.f32 %v1476, %v1477
    %v1479 = vsub.f32 1.0, %v1478
    %v1480 = vmul.f32 %v1477, %v1479
    %v1481 = vadd.f32 %v1477, %v1480
    %vm1482 = vweird.f32 %v1476
    %vm1483 = vweird.f32 %v1477
    %vm1484 = vmor %vm1482, %vm1483
    %v1485 = vsel %vm1484, %v1477, %v1481
    %v1486 = vand.u32 2147483647, %v1476
    %vm1487 = vcmp.eq.f32.partialorder %v1486, 8.507059e+37
    %v1488 = vand.u32 %v1476, 2147483648
    %v1489 = vor.u32 1.1754944e-38, %v1488
    %v1490 = vsel %vm1487, %v1489, %v1485
    %v1491 = vmul.f32 1.0, %v1490
    %vm1492 = vcmask 1024
    %1493 = vst.msk [vmem:[%s2] sm:$0x3] %vm1492, %v1491
    // Predicated region
    $region14: #{tpu_custom_call.1} parent=1 // pred_check
      _
    $region15: #{tpu_custom_call.1} parent=1 // pred_check_branch
      %1495 = sbr.rel (0) target = $region17
    $region16: #{tpu_custom_call.1} parent=1 // pred_region
      _
    $region17: #{tpu_custom_call.1} parent=1 // pred_fallthru
      _
    // Predicated region
    $region18: #{tpu_custom_call.1} parent=1 // pred_check
      _
    $region19: #{tpu_custom_call.1} parent=1 // pred_check_branch
      %1497 = sbr.rel (0) target = $region21
    $region20: #{tpu_custom_call.1} parent=1 // pred_region
      _
    $region21: #{tpu_custom_call.1} parent=1 // pred_fallthru
      _
    %1498 = vsyncpa [#allocation3], 1

</llo_original>
